<compile_context>
chip_gen: v5e
topology: v5e:2x2
jax: 0.10.0
libtpu: 0.0.40
codegen_flags: <defaults>
</compile_context>

<pallas_src>
import functools

import jax
import jax.numpy as jnp
from jax import lax
from jax.experimental import pallas as pl
from jax.experimental.pallas import tpu as pltpu


# --------------------------------------------------------------------------- #
# Kernel body
# --------------------------------------------------------------------------- #
def _transformer_layer_body(
    x_ref, mask_ref,
    wqkv_ref, bqkv_ref, wo_ref, bo_ref,
    ln1_g_ref, ln1_b_ref,
    w1_ref, b1_ref, w2_ref, b2_ref,
    ln2_g_ref, ln2_b_ref,
    out_ref,
    *, num_heads, hidden_size, causal, approx_softmax, eps=1e-5,
):
    H = hidden_size
    nh = num_heads
    cd = wqkv_ref.dtype            # MXU compute dtype (bf16 fast path / f32 verify path)

    x = x_ref[...].astype(jnp.float32)          # (S, H)
    S = x.shape[0]

    # ---- fused QKV projection: one wide matmul; cast to compute dtype ONCE ----
    qkv = (jnp.dot(x.astype(cd), wqkv_ref[...],
                   preferred_element_type=jnp.float32)
           + bqkv_ref[...]).astype(cd)          # (S, 3*nh*H) in cd

    # ---- mask (replacement semantics, identical to torch.masked_fill) ----
    if causal:
        # Generated in-kernel: no HBM mask traffic, no VMEM mask buffers.
        row = lax.broadcasted_iota(jnp.int32, (S, S), 0)
        col = lax.broadcasted_iota(jnp.int32, (S, S), 1)
        keep = col <= row
    else:
        keep = mask_ref[...] != 0               # bf16 0/1 mask, streamed at half width

    # ---- per-head attention (unscaled dot product, matching the module) ----
    # TODO(synk): pad/align head dim to 128 (256 on v6e/v7x) or use a batched
    # dot_general to avoid lane-unaligned slices and MXU under-utilization.
    acc = None
    for h in range(nh):  # static unroll; only small (S,S)/(S,H) math per head
        q = qkv[:, h * H:(h + 1) * H]                       # (S, H)
        k = qkv[:, (nh + h) * H:(nh + h + 1) * H]           # (S, H)
        v = qkv[:, (2 * nh + h) * H:(2 * nh + h + 1) * H]   # (S, H)

        # q @ k^T without materializing the transpose
        s = lax.dot_general(
            q, k, dimension_numbers=(((1,), (1,)), ((), ())),
            preferred_element_type=jnp.float32)             # (S, S) f32
        s = jnp.where(keep, s, jnp.float32(-1e9))

        m = jnp.max(s, axis=-1, keepdims=True)
        e = jnp.exp(s - m)
        denom = jnp.sum(e, axis=-1, keepdims=True)
        if approx_softmax:
            p = e * pl.reciprocal(denom, approx=True)       # EUP slot, not VALU divide
        else:
            p = e / denom                                   # exact path for verification

        ctx = jnp.dot(p.astype(cd), v,
                      preferred_element_type=jnp.float32)   # (S, H) f32
        # per-head output projection accumulated directly (no concat relayout)
        head_out = jnp.dot(ctx.astype(cd), wo_ref[pl.ds(h * H, H), :],
                           preferred_element_type=jnp.float32)
        acc = head_out if acc is None else acc + head_out

    attn = acc + bo_ref[...]

    # ---- residual + LayerNorm (biased variance, eps=1e-5, f32 statistics) ----
    y = x + attn
    mu = jnp.mean(y, axis=-1, keepdims=True)
    var = jnp.mean((y - mu) ** 2, axis=-1, keepdims=True)
    y = (y - mu) * lax.rsqrt(var + eps) * ln1_g_ref[...] + ln1_b_ref[...]

    # ---- feed-forward: Linear(H,4H) -> ReLU -> Linear(4H,H) ----
    # TODO(synk): tile the 4H reduction for large H instead of full residency.
    ff = jnp.dot(y.astype(cd), w1_ref[...],
                 preferred_element_type=jnp.float32) + b1_ref[...]
    ff = jnp.maximum(ff, 0.0)
    ff = jnp.dot(ff.astype(cd), w2_ref[...],
                 preferred_element_type=jnp.float32) + b2_ref[...]

    # ---- residual + LayerNorm ----
    z = y + ff
    mu2 = jnp.mean(z, axis=-1, keepdims=True)
    var2 = jnp.mean((z - mu2) ** 2, axis=-1, keepdims=True)
    out_ref[...] = ((z - mu2) * lax.rsqrt(var2 + eps)
                    * ln2_g_ref[...] + ln2_b_ref[...]).astype(out_ref.dtype)


def _kernel_with_mask(x_ref, mask_ref, *rest, **kw):
    _transformer_layer_body(x_ref, mask_ref, *rest, **kw)


def _kernel_causal(x_ref, *rest, **kw):
    _transformer_layer_body(x_ref, None, *rest, **kw)


# --------------------------------------------------------------------------- #
# Wrapper
# --------------------------------------------------------------------------- #
def _pack_params(params, num_heads, compute_dtype):
    """Fuse per-head Q/K/V weights into one (H, 3*nh*H) matrix; cast matmul
    weights to the MXU compute dtype (biases / LayerNorm params stay f32)."""
    nh = num_heads
    H = params["wo"].shape[-1]

    def heads_to_wide(w):   # (nh, H, H) -> (H, nh*H), head-major output blocks
        return jnp.transpose(w, (1, 0, 2)).reshape(H, nh * H)

    def heads_bias(b):      # (nh, 1, H) -> (1, nh*H)
        return b.reshape(1, nh * H)

    wqkv = jnp.concatenate([heads_to_wide(params["wq"]),
                            heads_to_wide(params["wk"]),
                            heads_to_wide(params["wv"])], axis=1)
    bqkv = jnp.concatenate([heads_bias(params["bq"]),
                            heads_bias(params["bk"]),
                            heads_bias(params["bv"])], axis=1)
    return {
        "wqkv": wqkv.astype(compute_dtype),
        "bqkv": bqkv.astype(jnp.float32),
        "wo": params["wo"].astype(compute_dtype),
        "bo": params["bo"].astype(jnp.float32),
        "ln1_g": params["ln1_g"].astype(jnp.float32),
        "ln1_b": params["ln1_b"].astype(jnp.float32),
        "w1": params["w1"].astype(compute_dtype),
        "b1": params["b1"].astype(jnp.float32),
        "w2": params["w2"].astype(compute_dtype),
        "b2": params["b2"].astype(jnp.float32),
        "ln2_g": params["ln2_g"].astype(jnp.float32),
        "ln2_b": params["ln2_b"].astype(jnp.float32),
    }


def _vmem_limit_bytes():
    """Generation-aware scoped VMEM: ~40 MiB on v7x (64 MiB phys), up to 96 MiB
    on v5e/v6e (128 MiB phys). Falls back to 48 MiB if the query is unavailable."""
    default = 48 * 1024 * 1024
    try:
        info = pltpu.get_tpu_info()
        cap = getattr(info, "vmem_capacity_bytes", None)
        if not cap:
            return default
        return int(min(max(cap - 24 * 1024 * 1024, 32 * 1024 * 1024),
                       96 * 1024 * 1024))
    except Exception:
        return default


# NOTE: dropout (attention_dropout / feedforward_dropout) is identity in eval
# mode; no stochastic dropout is applied in the kernel.
def transformer_layer(x, mask, params, num_heads, *,
                      compute_dtype=jnp.bfloat16, approx_softmax=True,
                      causal=False, out_dtype=None, single_buffer_weights=True):
    B, S, H = x.shape
    out_dtype = x.dtype if out_dtype is None else out_dtype
    packed = _pack_params(params, num_heads, compute_dtype)

    param_order = ["wqkv", "bqkv", "wo", "bo", "ln1_g", "ln1_b",
                   "w1", "b1", "w2", "b2", "ln2_g", "ln2_b"]
    param_args = [packed[k] for k in param_order]

    # Half-width 0/1 mask for the general (non-causal) path; values 0/1 are
    # exact in bf16, so replacement semantics stay bit-identical to masked_fill.
    data_args = [x]
    if not causal:
        data_args.append(mask.astype(jnp.bfloat16))

    # Advisory cost estimate so XLA schedules surrounding ops around this call.
    FF = int(params["w1"].shape[-1])
    flops_per_b = (2 * S * H * (3 * num_heads * H)
                   + num_heads * (4 * S * S * H + 2 * S * H * H)
                   + 4 * S * H * FF)
    param_bytes = sum(int(p.size) * p.dtype.itemsize for p in param_args)
    cost = pl.CostEstimate(
        flops=int(B * flops_per_b),
        transcendentals=int(B * (num_heads * S * S + 2 * S)),
        bytes_accessed=int(int(x.size) * x.dtype.itemsize
                           + (0 if causal else B * S * S * 2)
                           + B * S * H * jnp.dtype(out_dtype).itemsize
                           + param_bytes))

    kernel = functools.partial(
        _kernel_causal if causal else _kernel_with_mask,
        num_heads=num_heads, hidden_size=H, causal=causal,
        approx_softmax=approx_softmax)

    def run(weight_buffers):
        def full_spec(arr):
            nd = arr.ndim
            kwargs = {}
            if weight_buffers == 1:
                # Constant block index across the grid -> single-buffer the weights.
                kwargs["pipeline_mode"] = pl.Buffered(1)
            return pl.BlockSpec(arr.shape, lambda b, _nd=nd: (0,) * _nd, **kwargs)

        in_specs = [pl.BlockSpec((pl.Squeezed(), S, H), lambda b: (b, 0, 0))]
        if not causal:
            in_specs.append(pl.BlockSpec((pl.Squeezed(), S, S),
                                         lambda b: (b, 0, 0)))
        in_specs += [full_spec(p) for p in param_args]

        call = pl.pallas_call(
            kernel,
            out_shape=jax.ShapeDtypeStruct((B, S, H), out_dtype),
            grid=(B,),
            in_specs=in_specs,
            out_specs=pl.BlockSpec((pl.Squeezed(), S, H), lambda b: (b, 0, 0)),
            compiler_params=pltpu.CompilerParams(
                dimension_semantics=("parallel",),
                vmem_limit_bytes=_vmem_limit_bytes()),
            cost_estimate=cost,
        )
        return call(*data_args, *param_args)

    if single_buffer_weights:
        try:
            return run(1)
        except Exception:
            # Graceful fallback to default double-buffering if Buffered(1) is
            # not supported by the installed Pallas/Mosaic version.
            return run(2)
    return run(2)


# ---------------- pure-JAX reference (mirrors the PyTorch forward) ----------------
def reference(x, mask, p, num_heads, eps=1e-5):
    heads = []
    for h in range(num_heads):
        q = x @ p["wq"][h] + p["bq"][h]
        k = x @ p["wk"][h] + p["bk"][h]
        v = x @ p["wv"][h] + p["bv"][h]
        s = q @ jnp.swapaxes(k, -1, -2)
        s = jnp.where(mask == 0, -1e9, s)
        a = jax.nn.softmax(s, axis=-1)
        heads.append(a @ v)
    attn = jnp.concatenate(heads, axis=-1) @ p["wo"] + p["bo"]

    def ln(t, g, b):
        mu = jnp.mean(t, axis=-1, keepdims=True)
        var = jnp.mean((t - mu) ** 2, axis=-1, keepdims=True)
        return (t - mu) / jnp.sqrt(var + eps) * g + b

    y = ln(x + attn, p["ln1_g"], p["ln1_b"])
    ff = jax.nn.relu(y @ p["w1"] + p["b1"]) @ p["w2"] + p["b2"]
    return ln(y + ff, p["ln2_g"], p["ln2_b"])


if __name__ == "__main__":
    B, S, H = 2, 8, 32
    num_heads = 2
    FF = 4 * H

    key = jax.random.PRNGKey(0)
    ks = jax.random.split(key, 16)
    scale = 0.05

    params = {
        "wq": jax.random.normal(ks[0], (num_heads, H, H), jnp.float32) * scale,
        "bq": jax.random.normal(ks[1], (num_heads, 1, H), jnp.float32) * scale,
        "wk": jax.random.normal(ks[2], (num_heads, H, H), jnp.float32) * scale,
        "bk": jax.random.normal(ks[3], (num_heads, 1, H), jnp.float32) * scale,
        "wv": jax.random.normal(ks[4], (num_heads, H, H), jnp.float32) * scale,
        "bv": jax.random.normal(ks[5], (num_heads, 1, H), jnp.float32) * scale,
        "wo": jax.random.normal(ks[6], (num_heads * H, H), jnp.float32) * scale,
        "bo": jax.random.normal(ks[7], (1, H), jnp.float32) * scale,
        "ln1_g": jnp.ones((1, H), jnp.float32),
        "ln1_b": jnp.zeros((1, H), jnp.float32),
        "w1": jax.random.normal(ks[8], (H, FF), jnp.float32) * scale,
        "b1": jax.random.normal(ks[9], (1, FF), jnp.float32) * scale,
        "w2": jax.random.normal(ks[10], (FF, H), jnp.float32) * scale,
        "b2": jax.random.normal(ks[11], (1, H), jnp.float32) * scale,
        "ln2_g": jnp.ones((1, H), jnp.float32),
        "ln2_b": jnp.zeros((1, H), jnp.float32),
    }

    x = jax.random.normal(ks[12], (B, S, H), jnp.float32)
    # causal-style 0/1 mask (0 => masked with -1e9), shape (B, S, S)
    mask = jnp.tile(jnp.tril(jnp.ones((S, S), jnp.float32))[None], (B, 1, 1))

    ref = reference(x, mask, params, num_heads)

    # Fast path: in-kernel causal mask (no HBM mask traffic), bf16 MXU inputs
    # with f32 accumulation, approx softmax reciprocal, bf16 output store.
    out = jax.block_until_ready(
        transformer_layer(x, mask, params, num_heads,
                          causal=True, out_dtype=jnp.bfloat16))
    assert out.shape == (B, S, H)
    assert float(jnp.max(jnp.abs(out.astype(jnp.float32) - ref))) < 0.1, \
        "bf16 path deviates too much"

    # Exact path: f32 matmuls, exact softmax, streamed bf16 0/1 mask (general
    # mask support), f32 output; tight check vs the pure-JAX reference.
    out_f32 = jax.block_until_ready(
        transformer_layer(x, mask, params, num_heads,
                          compute_dtype=jnp.float32, approx_softmax=False,
                          causal=False))
    assert jnp.allclose(out_f32, ref, atol=1e-4, rtol=1e-4), "mismatch vs reference"

    print("KERNEL_OK")
</pallas_src>

<mosaic_0001>
module attributes {stable_mosaic.version = 11 : i64} {
  func.func @_kernel_causal(%arg0: i32, %arg1: memref<1x8x32xf32, #tpu.memory_space<vmem>>, %arg2: memref<32x192xbf16, #tpu.memory_space<vmem>>, %arg3: memref<1x192xf32, #tpu.memory_space<vmem>>, %arg4: memref<64x32xbf16, #tpu.memory_space<vmem>>, %arg5: memref<1x32xf32, #tpu.memory_space<vmem>>, %arg6: memref<1x32xf32, #tpu.memory_space<vmem>>, %arg7: memref<1x32xf32, #tpu.memory_space<vmem>>, %arg8: memref<32x128xbf16, #tpu.memory_space<vmem>>, %arg9: memref<1x128xf32, #tpu.memory_space<vmem>>, %arg10: memref<128x32xbf16, #tpu.memory_space<vmem>>, %arg11: memref<1x32xf32, #tpu.memory_space<vmem>>, %arg12: memref<1x32xf32, #tpu.memory_space<vmem>>, %arg13: memref<1x32xf32, #tpu.memory_space<vmem>>, %arg14: memref<1x8x32xbf16, #tpu.memory_space<vmem>>) attributes {dimension_semantics = [#tpu.dimension_semantics<parallel>], iteration_bounds = array<i64: 2>, scalar_prefetch = 0 : i64, scratch_operands = 0 : i64, tpu.core_type = #tpu.core_type<tc>, window_params = [{transform_indices = @transform_0, window_bounds = array<i64: 1, 8, 32>}, {pipeline_mode = #tpu.pipeline_mode<synchronous>, transform_indices = @transform_1, window_bounds = array<i64: 32, 192>}, {pipeline_mode = #tpu.pipeline_mode<synchronous>, transform_indices = @transform_2, window_bounds = array<i64: 1, 192>}, {pipeline_mode = #tpu.pipeline_mode<synchronous>, transform_indices = @transform_3, window_bounds = array<i64: 64, 32>}, {pipeline_mode = #tpu.pipeline_mode<synchronous>, transform_indices = @transform_4, window_bounds = array<i64: 1, 32>}, {pipeline_mode = #tpu.pipeline_mode<synchronous>, transform_indices = @transform_5, window_bounds = array<i64: 1, 32>}, {pipeline_mode = #tpu.pipeline_mode<synchronous>, transform_indices = @transform_6, window_bounds = array<i64: 1, 32>}, {pipeline_mode = #tpu.pipeline_mode<synchronous>, transform_indices = @transform_7, window_bounds = array<i64: 32, 128>}, {pipeline_mode = #tpu.pipeline_mode<synchronous>, transform_indices = @transform_8, window_bounds = array<i64: 1, 128>}, {pipeline_mode = #tpu.pipeline_mode<synchronous>, transform_indices = @transform_9, window_bounds = array<i64: 128, 32>}, {pipeline_mode = #tpu.pipeline_mode<synchronous>, transform_indices = @transform_10, window_bounds = array<i64: 1, 32>}, {pipeline_mode = #tpu.pipeline_mode<synchronous>, transform_indices = @transform_11, window_bounds = array<i64: 1, 32>}, {pipeline_mode = #tpu.pipeline_mode<synchronous>, transform_indices = @transform_12, window_bounds = array<i64: 1, 32>}, {transform_indices = @transform_13, window_bounds = array<i64: 1, 8, 32>}]} {
    %c0 = arith.constant 0 : index
    %c0_0 = arith.constant 0 : index
    %c0_1 = arith.constant 0 : index
    %0 = vector.load %arg1[%c0, %c0_0, %c0_1] : memref<1x8x32xf32, #tpu.memory_space<vmem>>, vector<1x8x32xf32>
    %1 = vector.shape_cast %0 : vector<1x8x32xf32> to vector<8x32xf32>
    %2 = arith.truncf %1 : vector<8x32xf32> to vector<8x32xbf16>
    %c0_2 = arith.constant 0 : index
    %c0_3 = arith.constant 0 : index
    %3 = vector.load %arg2[%c0_2, %c0_3] : memref<32x192xbf16, #tpu.memory_space<vmem>>, vector<32x192xbf16>
    %cst = arith.constant dense<0.000000e+00> : vector<8x192xf32>
    %4 = tpu.matmul %2, %3, %cst {dimension_numbers = #tpu.dot_dimension_numbers<[1], [0], [0], [1], [0, 0, 1, 1], [], []>} : vector<8x32xbf16>, vector<32x192xbf16>, vector<8x192xf32> -> vector<8x192xf32>
    %c0_4 = arith.constant 0 : index
    %c0_5 = arith.constant 0 : index
    %5 = vector.load %arg3[%c0_4, %c0_5] : memref<1x192xf32, #tpu.memory_space<vmem>>, vector<1x192xf32>
    %6 = vector.broadcast %5 : vector<1x192xf32> to vector<8x192xf32>
    %7 = arith.addf %4, %6 : vector<8x192xf32>
    %8 = arith.truncf %7 : vector<8x192xf32> to vector<8x192xbf16>
    %9 = tpu.iota {dimensions = array<i32: 0>} : vector<8x8xi32>
    %10 = tpu.iota {dimensions = array<i32: 1>} : vector<8x8xi32>
    %11 = arith.cmpi sle, %10, %9 : vector<8x8xi32>
    %12 = vector.extract_strided_slice %8 {offsets = [0, 0], sizes = [8, 32], strides = [1, 1]} : vector<8x192xbf16> to vector<8x32xbf16>
    %13 = vector.extract_strided_slice %8 {offsets = [0, 64], sizes = [8, 32], strides = [1, 1]} : vector<8x192xbf16> to vector<8x32xbf16>
    %14 = vector.extract_strided_slice %8 {offsets = [0, 128], sizes = [8, 32], strides = [1, 1]} : vector<8x192xbf16> to vector<8x32xbf16>
    %cst_6 = arith.constant dense<0.000000e+00> : vector<8x8xf32>
    %15 = tpu.matmul %12, %13, %cst_6 {dimension_numbers = #tpu.dot_dimension_numbers<[1], [1], [0], [0], [0, 0, 1, 0], [], []>} : vector<8x32xbf16>, vector<8x32xbf16>, vector<8x8xf32> -> vector<8x8xf32>
    %cst_7 = arith.constant -1.000000e+09 : f32
    %16 = vector.broadcast %cst_7 : f32 to vector<8x8xf32>
    %17 = arith.select %11, %15, %16 : vector<8x8xi1>, vector<8x8xf32>
    %cst_8 = arith.constant dense<0xFF800000> : vector<8xf32>
    %18 = vector.multi_reduction <maximumf>, %17, %cst_8 [1] : vector<8x8xf32> to vector<8xf32>
    %19 = vector.shape_cast %18 : vector<8xf32> to vector<8x1xf32>
    %20 = vector.broadcast %19 : vector<8x1xf32> to vector<8x8xf32>
    %21 = arith.subf %17, %20 : vector<8x8xf32>
    %22 = math.exp %21 : vector<8x8xf32>
    %cst_9 = arith.constant dense<0.000000e+00> : vector<8xf32>
    %23 = vector.multi_reduction <add>, %22, %cst_9 [1] : vector<8x8xf32> to vector<8xf32>
    %24 = vector.shape_cast %23 : vector<8xf32> to vector<8x1xf32>
    %25 = tpu.reciprocal %24 {approx = true} : vector<8x1xf32> -> vector<8x1xf32>
    %26 = vector.broadcast %25 : vector<8x1xf32> to vector<8x8xf32>
    %27 = arith.mulf %22, %26 : vector<8x8xf32>
    %28 = arith.truncf %27 : vector<8x8xf32> to vector<8x8xbf16>
    %cst_10 = arith.constant dense<0.000000e+00> : vector<8x32xf32>
    %29 = tpu.matmul %28, %14, %cst_10 {dimension_numbers = #tpu.dot_dimension_numbers<[1], [0], [0], [1], [0, 0, 1, 1], [], []>} : vector<8x8xbf16>, vector<8x32xbf16>, vector<8x32xf32> -> vector<8x32xf32>
    %30 = arith.truncf %29 : vector<8x32xf32> to vector<8x32xbf16>
    %c0_11 = arith.constant 0 : index
    %c0_12 = arith.constant 0 : index
    %31 = vector.load %arg4[%c0_11, %c0_12] : memref<64x32xbf16, #tpu.memory_space<vmem>>, vector<32x32xbf16>
    %cst_13 = arith.constant dense<0.000000e+00> : vector<8x32xf32>
    %32 = tpu.matmul %30, %31, %cst_13 {dimension_numbers = #tpu.dot_dimension_numbers<[1], [0], [0], [1], [0, 0, 1, 1], [], []>} : vector<8x32xbf16>, vector<32x32xbf16>, vector<8x32xf32> -> vector<8x32xf32>
    %33 = vector.extract_strided_slice %8 {offsets = [0, 32], sizes = [8, 32], strides = [1, 1]} : vector<8x192xbf16> to vector<8x32xbf16>
    %34 = vector.extract_strided_slice %8 {offsets = [0, 96], sizes = [8, 32], strides = [1, 1]} : vector<8x192xbf16> to vector<8x32xbf16>
    %35 = vector.extract_strided_slice %8 {offsets = [0, 160], sizes = [8, 32], strides = [1, 1]} : vector<8x192xbf16> to vector<8x32xbf16>
    %cst_14 = arith.constant dense<0.000000e+00> : vector<8x8xf32>
    %36 = tpu.matmul %33, %34, %cst_14 {dimension_numbers = #tpu.dot_dimension_numbers<[1], [1], [0], [0], [0, 0, 1, 0], [], []>} : vector<8x32xbf16>, vector<8x32xbf16>, vector<8x8xf32> -> vector<8x8xf32>
    %cst_15 = arith.constant -1.000000e+09 : f32
    %37 = vector.broadcast %cst_15 : f32 to vector<8x8xf32>
    %38 = arith.select %11, %36, %37 : vector<8x8xi1>, vector<8x8xf32>
    %cst_16 = arith.constant dense<0xFF800000> : vector<8xf32>
    %39 = vector.multi_reduction <maximumf>, %38, %cst_16 [1] : vector<8x8xf32> to vector<8xf32>
    %40 = vector.shape_cast %39 : vector<8xf32> to vector<8x1xf32>
    %41 = vector.broadcast %40 : vector<8x1xf32> to vector<8x8xf32>
    %42 = arith.subf %38, %41 : vector<8x8xf32>
    %43 = math.exp %42 : vector<8x8xf32>
    %cst_17 = arith.constant dense<0.000000e+00> : vector<8xf32>
    %44 = vector.multi_reduction <add>, %43, %cst_17 [1] : vector<8x8xf32> to vector<8xf32>
    %45 = vector.shape_cast %44 : vector<8xf32> to vector<8x1xf32>
    %46 = tpu.reciprocal %45 {approx = true} : vector<8x1xf32> -> vector<8x1xf32>
    %47 = vector.broadcast %46 : vector<8x1xf32> to vector<8x8xf32>
    %48 = arith.mulf %43, %47 : vector<8x8xf32>
    %49 = arith.truncf %48 : vector<8x8xf32> to vector<8x8xbf16>
    %cst_18 = arith.constant dense<0.000000e+00> : vector<8x32xf32>
    %50 = tpu.matmul %49, %35, %cst_18 {dimension_numbers = #tpu.dot_dimension_numbers<[1], [0], [0], [1], [0, 0, 1, 1], [], []>} : vector<8x8xbf16>, vector<8x32xbf16>, vector<8x32xf32> -> vector<8x32xf32>
    %51 = arith.truncf %50 : vector<8x32xf32> to vector<8x32xbf16>
    %c32 = arith.constant 32 : index
    %c0_19 = arith.constant 0 : index
    %52 = vector.load %arg4[%c32, %c0_19] : memref<64x32xbf16, #tpu.memory_space<vmem>>, vector<32x32xbf16>
    %cst_20 = arith.constant dense<0.000000e+00> : vector<8x32xf32>
    %53 = tpu.matmul %51, %52, %cst_20 {dimension_numbers = #tpu.dot_dimension_numbers<[1], [0], [0], [1], [0, 0, 1, 1], [], []>} : vector<8x32xbf16>, vector<32x32xbf16>, vector<8x32xf32> -> vector<8x32xf32>
    %54 = arith.addf %32, %53 : vector<8x32xf32>
    %c0_21 = arith.constant 0 : index
    %c0_22 = arith.constant 0 : index
    %55 = vector.load %arg5[%c0_21, %c0_22] : memref<1x32xf32, #tpu.memory_space<vmem>>, vector<1x32xf32>
    %56 = vector.broadcast %55 : vector<1x32xf32> to vector<8x32xf32>
    %57 = arith.addf %54, %56 : vector<8x32xf32>
    %58 = arith.addf %1, %57 : vector<8x32xf32>
    %cst_23 = arith.constant dense<0.000000e+00> : vector<8xf32>
    %59 = vector.multi_reduction <add>, %58, %cst_23 [1] : vector<8x32xf32> to vector<8xf32>
    %60 = vector.shape_cast %59 : vector<8xf32> to vector<8x1xf32>
    %cst_24 = arith.constant 3.200000e+01 : f32
    %61 = vector.broadcast %cst_24 : f32 to vector<8x1xf32>
    %62 = arith.divf %60, %61 : vector<8x1xf32>
    %63 = vector.broadcast %62 : vector<8x1xf32> to vector<8x32xf32>
    %64 = arith.subf %58, %63 : vector<8x32xf32>
    %65 = arith.mulf %64, %64 : vector<8x32xf32>
    %cst_25 = arith.constant dense<0.000000e+00> : vector<8xf32>
    %66 = vector.multi_reduction <add>, %65, %cst_25 [1] : vector<8x32xf32> to vector<8xf32>
    %67 = vector.shape_cast %66 : vector<8xf32> to vector<8x1xf32>
    %cst_26 = arith.constant 3.200000e+01 : f32
    %68 = vector.broadcast %cst_26 : f32 to vector<8x1xf32>
    %69 = arith.divf %67, %68 : vector<8x1xf32>
    %70 = vector.broadcast %62 : vector<8x1xf32> to vector<8x32xf32>
    %71 = arith.subf %58, %70 : vector<8x32xf32>
    %cst_27 = arith.constant 9.99999974E-6 : f32
    %72 = vector.broadcast %cst_27 : f32 to vector<8x1xf32>
    %73 = arith.addf %69, %72 : vector<8x1xf32>
    %74 = math.rsqrt %73 : vector<8x1xf32>
    %75 = vector.broadcast %74 : vector<8x1xf32> to vector<8x32xf32>
    %76 = arith.mulf %71, %75 : vector<8x32xf32>
    %c0_28 = arith.constant 0 : index
    %c0_29 = arith.constant 0 : index
    %77 = vector.load %arg6[%c0_28, %c0_29] : memref<1x32xf32, #tpu.memory_space<vmem>>, vector<1x32xf32>
    %78 = vector.broadcast %77 : vector<1x32xf32> to vector<8x32xf32>
    %79 = arith.mulf %76, %78 : vector<8x32xf32>
    %c0_30 = arith.constant 0 : index
    %c0_31 = arith.constant 0 : index
    %80 = vector.load %arg7[%c0_30, %c0_31] : memref<1x32xf32, #tpu.memory_space<vmem>>, vector<1x32xf32>
    %81 = vector.broadcast %80 : vector<1x32xf32> to vector<8x32xf32>
    %82 = arith.addf %79, %81 : vector<8x32xf32>
    %83 = arith.truncf %82 : vector<8x32xf32> to vector<8x32xbf16>
    %c0_32 = arith.constant 0 : index
    %c0_33 = arith.constant 0 : index
    %84 = vector.load %arg8[%c0_32, %c0_33] : memref<32x128xbf16, #tpu.memory_space<vmem>>, vector<32x128xbf16>
    %cst_34 = arith.constant dense<0.000000e+00> : vector<8x128xf32>
    %85 = tpu.matmul %83, %84, %cst_34 {dimension_numbers = #tpu.dot_dimension_numbers<[1], [0], [0], [1], [0, 0, 1, 1], [], []>} : vector<8x32xbf16>, vector<32x128xbf16>, vector<8x128xf32> -> vector<8x128xf32>
    %c0_35 = arith.constant 0 : index
    %c0_36 = arith.constant 0 : index
    %86 = vector.load %arg9[%c0_35, %c0_36] : memref<1x128xf32, #tpu.memory_space<vmem>>, vector<1x128xf32>
    %87 = vector.broadcast %86 : vector<1x128xf32> to vector<8x128xf32>
    %88 = arith.addf %85, %87 : vector<8x128xf32>
    %cst_37 = arith.constant 0.000000e+00 : f32
    %89 = vector.broadcast %cst_37 : f32 to vector<8x128xf32>
    %90 = arith.maximumf %88, %89 : vector<8x128xf32>
    %91 = arith.truncf %90 : vector<8x128xf32> to vector<8x128xbf16>
    %c0_38 = arith.constant 0 : index
    %c0_39 = arith.constant 0 : index
    %92 = vector.load %arg10[%c0_38, %c0_39] : memref<128x32xbf16, #tpu.memory_space<vmem>>, vector<128x32xbf16>
    %cst_40 = arith.constant dense<0.000000e+00> : vector<8x32xf32>
    %93 = tpu.matmul %91, %92, %cst_40 {dimension_numbers = #tpu.dot_dimension_numbers<[1], [0], [0], [1], [0, 0, 1, 1], [], []>} : vector<8x128xbf16>, vector<128x32xbf16>, vector<8x32xf32> -> vector<8x32xf32>
    %c0_41 = arith.constant 0 : index
    %c0_42 = arith.constant 0 : index
    %94 = vector.load %arg11[%c0_41, %c0_42] : memref<1x32xf32, #tpu.memory_space<vmem>>, vector<1x32xf32>
    %95 = vector.broadcast %94 : vector<1x32xf32> to vector<8x32xf32>
    %96 = arith.addf %93, %95 : vector<8x32xf32>
    %97 = arith.addf %82, %96 : vector<8x32xf32>
    %cst_43 = arith.constant dense<0.000000e+00> : vector<8xf32>
    %98 = vector.multi_reduction <add>, %97, %cst_43 [1] : vector<8x32xf32> to vector<8xf32>
    %99 = vector.shape_cast %98 : vector<8xf32> to vector<8x1xf32>
    %cst_44 = arith.constant 3.200000e+01 : f32
    %100 = vector.broadcast %cst_44 : f32 to vector<8x1xf32>
    %101 = arith.divf %99, %100 : vector<8x1xf32>
    %102 = vector.broadcast %101 : vector<8x1xf32> to vector<8x32xf32>
    %103 = arith.subf %97, %102 : vector<8x32xf32>
    %104 = arith.mulf %103, %103 : vector<8x32xf32>
    %cst_45 = arith.constant dense<0.000000e+00> : vector<8xf32>
    %105 = vector.multi_reduction <add>, %104, %cst_45 [1] : vector<8x32xf32> to vector<8xf32>
    %106 = vector.shape_cast %105 : vector<8xf32> to vector<8x1xf32>
    %cst_46 = arith.constant 3.200000e+01 : f32
    %107 = vector.broadcast %cst_46 : f32 to vector<8x1xf32>
    %108 = arith.divf %106, %107 : vector<8x1xf32>
    %109 = vector.broadcast %101 : vector<8x1xf32> to vector<8x32xf32>
    %110 = arith.subf %97, %109 : vector<8x32xf32>
    %cst_47 = arith.constant 9.99999974E-6 : f32
    %111 = vector.broadcast %cst_47 : f32 to vector<8x1xf32>
    %112 = arith.addf %108, %111 : vector<8x1xf32>
    %113 = math.rsqrt %112 : vector<8x1xf32>
    %114 = vector.broadcast %113 : vector<8x1xf32> to vector<8x32xf32>
    %115 = arith.mulf %110, %114 : vector<8x32xf32>
    %c0_48 = arith.constant 0 : index
    %c0_49 = arith.constant 0 : index
    %116 = vector.load %arg12[%c0_48, %c0_49] : memref<1x32xf32, #tpu.memory_space<vmem>>, vector<1x32xf32>
    %117 = vector.broadcast %116 : vector<1x32xf32> to vector<8x32xf32>
    %118 = arith.mulf %115, %117 : vector<8x32xf32>
    %c0_50 = arith.constant 0 : index
    %c0_51 = arith.constant 0 : index
    %119 = vector.load %arg13[%c0_50, %c0_51] : memref<1x32xf32, #tpu.memory_space<vmem>>, vector<1x32xf32>
    %120 = vector.broadcast %119 : vector<1x32xf32> to vector<8x32xf32>
    %121 = arith.addf %118, %120 : vector<8x32xf32>
    %122 = arith.truncf %121 : vector<8x32xf32> to vector<8x32xbf16>
    %c0_52 = arith.constant 0 : index
    %c0_53 = arith.constant 0 : index
    %c0_54 = arith.constant 0 : index
    %123 = vector.load %arg14[%c0_52, %c0_53, %c0_54] : memref<1x8x32xbf16, #tpu.memory_space<vmem>>, vector<1x8x32xbf16>
    %124 = vector.shape_cast %123 : vector<1x8x32xbf16> to vector<8x32xbf16>
    %125 = vector.shape_cast %122 : vector<8x32xbf16> to vector<1x8x32xbf16>
    tpu.vector_store %arg14[%c0_52, %c0_53, %c0_54], %125 {strides = array<i32>} : memref<1x8x32xbf16, #tpu.memory_space<vmem>>, vector<1x8x32xbf16>,
    return
  }
  func.func @transform_0(%arg0: i32) -> (i32, i32, i32) {
    %c0_i32 = arith.constant 0 : i32
    %c0_i32_0 = arith.constant 0 : i32
    %c0_i32_1 = arith.constant 0 : i32
    return %arg0, %c0_i32, %c0_i32_0 : i32, i32, i32
  }
  func.func @transform_1(%arg0: i32) -> (i32, i32) {
    %c0_i32 = arith.constant 0 : i32
    %c0_i32_0 = arith.constant 0 : i32
    %c0_i32_1 = arith.constant 0 : i32
    return %c0_i32, %c0_i32_0 : i32, i32
  }
  func.func @transform_2(%arg0: i32) -> (i32, i32) {
    %c0_i32 = arith.constant 0 : i32
    %c0_i32_0 = arith.constant 0 : i32
    %c0_i32_1 = arith.constant 0 : i32
    return %c0_i32, %c0_i32_0 : i32, i32
  }
  func.func @transform_3(%arg0: i32) -> (i32, i32) {
    %c0_i32 = arith.constant 0 : i32
    %c0_i32_0 = arith.constant 0 : i32
    %c0_i32_1 = arith.constant 0 : i32
    return %c0_i32, %c0_i32_0 : i32, i32
  }
  func.func @transform_4(%arg0: i32) -> (i32, i32) {
    %c0_i32 = arith.constant 0 : i32
    %c0_i32_0 = arith.constant 0 : i32
    %c0_i32_1 = arith.constant 0 : i32
    return %c0_i32, %c0_i32_0 : i32, i32
  }
  func.func @transform_5(%arg0: i32) -> (i32, i32) {
    %c0_i32 = arith.constant 0 : i32
    %c0_i32_0 = arith.constant 0 : i32
    %c0_i32_1 = arith.constant 0 : i32
    return %c0_i32, %c0_i32_0 : i32, i32
  }
  func.func @transform_6(%arg0: i32) -> (i32, i32) {
    %c0_i32 = arith.constant 0 : i32
    %c0_i32_0 = arith.constant 0 : i32
    %c0_i32_1 = arith.constant 0 : i32
    return %c0_i32, %c0_i32_0 : i32, i32
  }
  func.func @transform_7(%arg0: i32) -> (i32, i32) {
    %c0_i32 = arith.constant 0 : i32
    %c0_i32_0 = arith.constant 0 : i32
    %c0_i32_1 = arith.constant 0 : i32
    return %c0_i32, %c0_i32_0 : i32, i32
  }
  func.func @transform_8(%arg0: i32) -> (i32, i32) {
    %c0_i32 = arith.constant 0 : i32
    %c0_i32_0 = arith.constant 0 : i32
    %c0_i32_1 = arith.constant 0 : i32
    return %c0_i32, %c0_i32_0 : i32, i32
  }
  func.func @transform_9(%arg0: i32) -> (i32, i32) {
    %c0_i32 = arith.constant 0 : i32
    %c0_i32_0 = arith.constant 0 : i32
    %c0_i32_1 = arith.constant 0 : i32
    return %c0_i32, %c0_i32_0 : i32, i32
  }
  func.func @transform_10(%arg0: i32) -> (i32, i32) {
    %c0_i32 = arith.constant 0 : i32
    %c0_i32_0 = arith.constant 0 : i32
    %c0_i32_1 = arith.constant 0 : i32
    return %c0_i32, %c0_i32_0 : i32, i32
  }
  func.func @transform_11(%arg0: i32) -> (i32, i32) {
    %c0_i32 = arith.constant 0 : i32
    %c0_i32_0 = arith.constant 0 : i32
    %c0_i32_1 = arith.constant 0 : i32
    return %c0_i32, %c0_i32_0 : i32, i32
  }
  func.func @transform_12(%arg0: i32) -> (i32, i32) {
    %c0_i32 = arith.constant 0 : i32
    %c0_i32_0 = arith.constant 0 : i32
    %c0_i32_1 = arith.constant 0 : i32
    return %c0_i32, %c0_i32_0 : i32, i32
  }
  func.func @transform_13(%arg0: i32) -> (i32, i32, i32) {
    %c0_i32 = arith.constant 0 : i32
    %c0_i32_0 = arith.constant 0 : i32
    %c0_i32_1 = arith.constant 0 : i32
    return %arg0, %c0_i32, %c0_i32_0 : i32, i32, i32
  }
}

module attributes {stable_mosaic.version = 11 : i64} {
  func.func @_kernel_causal(%arg0: i32, %arg1: memref<1x8x32xf32, #tpu.memory_space<vmem>>, %arg2: memref<32x192xbf16, #tpu.memory_space<vmem>>, %arg3: memref<1x192xf32, #tpu.memory_space<vmem>>, %arg4: memref<64x32xbf16, #tpu.memory_space<vmem>>, %arg5: memref<1x32xf32, #tpu.memory_space<vmem>>, %arg6: memref<1x32xf32, #tpu.memory_space<vmem>>, %arg7: memref<1x32xf32, #tpu.memory_space<vmem>>, %arg8: memref<32x128xbf16, #tpu.memory_space<vmem>>, %arg9: memref<1x128xf32, #tpu.memory_space<vmem>>, %arg10: memref<128x32xbf16, #tpu.memory_space<vmem>>, %arg11: memref<1x32xf32, #tpu.memory_space<vmem>>, %arg12: memref<1x32xf32, #tpu.memory_space<vmem>>, %arg13: memref<1x32xf32, #tpu.memory_space<vmem>>, %arg14: memref<1x8x32xbf16, #tpu.memory_space<vmem>>) attributes {dimension_semantics = [#tpu.dimension_semantics<parallel>], iteration_bounds = array<i64: 2>, scalar_prefetch = 0 : i64, scratch_operands = 0 : i64, tpu.core_type = #tpu.core_type<tc>, window_params = [{transform_indices = @transform_0, window_bounds = array<i64: 1, 8, 32>}, {pipeline_mode = #tpu.pipeline_mode<synchronous>, transform_indices = @transform_1, window_bounds = array<i64: 32, 192>}, {pipeline_mode = #tpu.pipeline_mode<synchronous>, transform_indices = @transform_2, window_bounds = array<i64: 1, 192>}, {pipeline_mode = #tpu.pipeline_mode<synchronous>, transform_indices = @transform_3, window_bounds = array<i64: 64, 32>}, {pipeline_mode = #tpu.pipeline_mode<synchronous>, transform_indices = @transform_4, window_bounds = array<i64: 1, 32>}, {pipeline_mode = #tpu.pipeline_mode<synchronous>, transform_indices = @transform_5, window_bounds = array<i64: 1, 32>}, {pipeline_mode = #tpu.pipeline_mode<synchronous>, transform_indices = @transform_6, window_bounds = array<i64: 1, 32>}, {pipeline_mode = #tpu.pipeline_mode<synchronous>, transform_indices = @transform_7, window_bounds = array<i64: 32, 128>}, {pipeline_mode = #tpu.pipeline_mode<synchronous>, transform_indices = @transform_8, window_bounds = array<i64: 1, 128>}, {pipeline_mode = #tpu.pipeline_mode<synchronous>, transform_indices = @transform_9, window_bounds = array<i64: 128, 32>}, {pipeline_mode = #tpu.pipeline_mode<synchronous>, transform_indices = @transform_10, window_bounds = array<i64: 1, 32>}, {pipeline_mode = #tpu.pipeline_mode<synchronous>, transform_indices = @transform_11, window_bounds = array<i64: 1, 32>}, {pipeline_mode = #tpu.pipeline_mode<synchronous>, transform_indices = @transform_12, window_bounds = array<i64: 1, 32>}, {transform_indices = @transform_13, window_bounds = array<i64: 1, 8, 32>}]} {
    %c0 = arith.constant 0 : index
    %c0_0 = arith.constant 0 : index
    %c0_1 = arith.constant 0 : index
    %0 = vector.load %arg1[%c0, %c0_0, %c0_1] : memref<1x8x32xf32, #tpu.memory_space<vmem>>, vector<1x8x32xf32>
    %1 = vector.shape_cast %0 : vector<1x8x32xf32> to vector<8x32xf32>
    %2 = arith.truncf %1 : vector<8x32xf32> to vector<8x32xbf16>
    %c0_2 = arith.constant 0 : index
    %c0_3 = arith.constant 0 : index
    %3 = vector.load %arg2[%c0_2, %c0_3] : memref<32x192xbf16, #tpu.memory_space<vmem>>, vector<32x192xbf16>
    %cst = arith.constant dense<0.000000e+00> : vector<8x192xf32>
    %4 = tpu.matmul %2, %3, %cst {dimension_numbers = #tpu.dot_dimension_numbers<[1], [0], [0], [1], [0, 0, 1, 1], [], []>} : vector<8x32xbf16>, vector<32x192xbf16>, vector<8x192xf32> -> vector<8x192xf32>
    %c0_4 = arith.constant 0 : index
    %c0_5 = arith.constant 0 : index
    %5 = vector.load %arg3[%c0_4, %c0_5] : memref<1x192xf32, #tpu.memory_space<vmem>>, vector<1x192xf32>
    %6 = vector.broadcast %5 : vector<1x192xf32> to vector<8x192xf32>
    %7 = arith.addf %4, %6 : vector<8x192xf32>
    %8 = arith.truncf %7 : vector<8x192xf32> to vector<8x192xbf16>
    %9 = tpu.iota {dimensions = array<i32: 0>} : vector<8x8xi32>
    %10 = tpu.iota {dimensions = array<i32: 1>} : vector<8x8xi32>
    %11 = arith.cmpi sle, %10, %9 : vector<8x8xi32>
    %12 = vector.extract_strided_slice %8 {offsets = [0, 0], sizes = [8, 32], strides = [1, 1]} : vector<8x192xbf16> to vector<8x32xbf16>
    %13 = vector.extract_strided_slice %8 {offsets = [0, 64], sizes = [8, 32], strides = [1, 1]} : vector<8x192xbf16> to vector<8x32xbf16>
    %14 = vector.extract_strided_slice %8 {offsets = [0, 128], sizes = [8, 32], strides = [1, 1]} : vector<8x192xbf16> to vector<8x32xbf16>
    %cst_6 = arith.constant dense<0.000000e+00> : vector<8x8xf32>
    %15 = tpu.matmul %12, %13, %cst_6 {dimension_numbers = #tpu.dot_dimension_numbers<[1], [1], [0], [0], [0, 0, 1, 0], [], []>} : vector<8x32xbf16>, vector<8x32xbf16>, vector<8x8xf32> -> vector<8x8xf32>
    %cst_7 = arith.constant -1.000000e+09 : f32
    %16 = vector.broadcast %cst_7 : f32 to vector<8x8xf32>
    %17 = arith.select %11, %15, %16 : vector<8x8xi1>, vector<8x8xf32>
    %cst_8 = arith.constant dense<0xFF800000> : vector<8xf32>
    %18 = vector.multi_reduction <maximumf>, %17, %cst_8 [1] : vector<8x8xf32> to vector<8xf32>
    %19 = vector.shape_cast %18 : vector<8xf32> to vector<8x1xf32>
    %20 = vector.broadcast %19 : vector<8x1xf32> to vector<8x8xf32>
    %21 = arith.subf %17, %20 : vector<8x8xf32>
    %22 = math.exp %21 : vector<8x8xf32>
    %cst_9 = arith.constant dense<0.000000e+00> : vector<8xf32>
    %23 = vector.multi_reduction <add>, %22, %cst_9 [1] : vector<8x8xf32> to vector<8xf32>
    %24 = vector.shape_cast %23 : vector<8xf32> to vector<8x1xf32>
    %25 = tpu.reciprocal %24 {approx = true} : vector<8x1xf32> -> vector<8x1xf32>
    %26 = vector.broadcast %25 : vector<8x1xf32> to vector<8x8xf32>
    %27 = arith.mulf %22, %26 : vector<8x8xf32>
    %28 = arith.truncf %27 : vector<8x8xf32> to vector<8x8xbf16>
    %cst_10 = arith.constant dense<0.000000e+00> : vector<8x32xf32>
    %29 = tpu.matmul %28, %14, %cst_10 {dimension_numbers = #tpu.dot_dimension_numbers<[1], [0], [0], [1], [0, 0, 1, 1], [], []>} : vector<8x8xbf16>, vector<8x32xbf16>, vector<8x32xf32> -> vector<8x32xf32>
    %30 = arith.truncf %29 : vector<8x32xf32> to vector<8x32xbf16>
    %c0_11 = arith.constant 0 : index
    %c0_12 = arith.constant 0 : index
    %31 = vector.load %arg4[%c0_11, %c0_12] : memref<64x32xbf16, #tpu.memory_space<vmem>>, vector<32x32xbf16>
    %cst_13 = arith.constant dense<0.000000e+00> : vector<8x32xf32>
    %32 = tpu.matmul %30, %31, %cst_13 {dimension_numbers = #tpu.dot_dimension_numbers<[1], [0], [0], [1], [0, 0, 1, 1], [], []>} : vector<8x32xbf16>, vector<32x32xbf16>, vector<8x32xf32> -> vector<8x32xf32>
    %33 = vector.extract_strided_slice %8 {offsets = [0, 32], sizes = [8, 32], strides = [1, 1]} : vector<8x192xbf16> to vector<8x32xbf16>
    %34 = vector.extract_strided_slice %8 {offsets = [0, 96], sizes = [8, 32], strides = [1, 1]} : vector<8x192xbf16> to vector<8x32xbf16>
    %35 = vector.extract_strided_slice %8 {offsets = [0, 160], sizes = [8, 32], strides = [1, 1]} : vector<8x192xbf16> to vector<8x32xbf16>
    %cst_14 = arith.constant dense<0.000000e+00> : vector<8x8xf32>
    %36 = tpu.matmul %33, %34, %cst_14 {dimension_numbers = #tpu.dot_dimension_numbers<[1], [1], [0], [0], [0, 0, 1, 0], [], []>} : vector<8x32xbf16>, vector<8x32xbf16>, vector<8x8xf32> -> vector<8x8xf32>
    %cst_15 = arith.constant -1.000000e+09 : f32
    %37 = vector.broadcast %cst_15 : f32 to vector<8x8xf32>
    %38 = arith.select %11, %36, %37 : vector<8x8xi1>, vector<8x8xf32>
    %cst_16 = arith.constant dense<0xFF800000> : vector<8xf32>
    %39 = vector.multi_reduction <maximumf>, %38, %cst_16 [1] : vector<8x8xf32> to vector<8xf32>
    %40 = vector.shape_cast %39 : vector<8xf32> to vector<8x1xf32>
    %41 = vector.broadcast %40 : vector<8x1xf32> to vector<8x8xf32>
    %42 = arith.subf %38, %41 : vector<8x8xf32>
    %43 = math.exp %42 : vector<8x8xf32>
    %cst_17 = arith.constant dense<0.000000e+00> : vector<8xf32>
    %44 = vector.multi_reduction <add>, %43, %cst_17 [1] : vector<8x8xf32> to vector<8xf32>
    %45 = vector.shape_cast %44 : vector<8xf32> to vector<8x1xf32>
    %46 = tpu.reciprocal %45 {approx = true} : vector<8x1xf32> -> vector<8x1xf32>
    %47 = vector.broadcast %46 : vector<8x1xf32> to vector<8x8xf32>
    %48 = arith.mulf %43, %47 : vector<8x8xf32>
    %49 = arith.truncf %48 : vector<8x8xf32> to vector<8x8xbf16>
    %cst_18 = arith.constant dense<0.000000e+00> : vector<8x32xf32>
    %50 = tpu.matmul %49, %35, %cst_18 {dimension_numbers = #tpu.dot_dimension_numbers<[1], [0], [0], [1], [0, 0, 1, 1], [], []>} : vector<8x8xbf16>, vector<8x32xbf16>, vector<8x32xf32> -> vector<8x32xf32>
    %51 = arith.truncf %50 : vector<8x32xf32> to vector<8x32xbf16>
    %c32 = arith.constant 32 : index
    %c0_19 = arith.constant 0 : index
    %52 = vector.load %arg4[%c32, %c0_19] : memref<64x32xbf16, #tpu.memory_space<vmem>>, vector<32x32xbf16>
    %cst_20 = arith.constant dense<0.000000e+00> : vector<8x32xf32>
    %53 = tpu.matmul %51, %52, %cst_20 {dimension_numbers = #tpu.dot_dimension_numbers<[1], [0], [0], [1], [0, 0, 1, 1], [], []>} : vector<8x32xbf16>, vector<32x32xbf16>, vector<8x32xf32> -> vector<8x32xf32>
    %54 = arith.addf %32, %53 : vector<8x32xf32>
    %c0_21 = arith.constant 0 : index
    %c0_22 = arith.constant 0 : index
    %55 = vector.load %arg5[%c0_21, %c0_22] : memref<1x32xf32, #tpu.memory_space<vmem>>, vector<1x32xf32>
    %56 = vector.broadcast %55 : vector<1x32xf32> to vector<8x32xf32>
    %57 = arith.addf %54, %56 : vector<8x32xf32>
    %58 = arith.addf %1, %57 : vector<8x32xf32>
    %cst_23 = arith.constant dense<0.000000e+00> : vector<8xf32>
    %59 = vector.multi_reduction <add>, %58, %cst_23 [1] : vector<8x32xf32> to vector<8xf32>
    %60 = vector.shape_cast %59 : vector<8xf32> to vector<8x1xf32>
    %cst_24 = arith.constant 3.200000e+01 : f32
    %61 = vector.broadcast %cst_24 : f32 to vector<8x1xf32>
    %62 = arith.divf %60, %61 : vector<8x1xf32>
    %63 = vector.broadcast %62 : vector<8x1xf32> to vector<8x32xf32>
    %64 = arith.subf %58, %63 : vector<8x32xf32>
    %65 = arith.mulf %64, %64 : vector<8x32xf32>
    %cst_25 = arith.constant dense<0.000000e+00> : vector<8xf32>
    %66 = vector.multi_reduction <add>, %65, %cst_25 [1] : vector<8x32xf32> to vector<8xf32>
    %67 = vector.shape_cast %66 : vector<8xf32> to vector<8x1xf32>
    %cst_26 = arith.constant 3.200000e+01 : f32
    %68 = vector.broadcast %cst_26 : f32 to vector<8x1xf32>
    %69 = arith.divf %67, %68 : vector<8x1xf32>
    %70 = vector.broadcast %62 : vector<8x1xf32> to vector<8x32xf32>
    %71 = arith.subf %58, %70 : vector<8x32xf32>
    %cst_27 = arith.constant 9.99999974E-6 : f32
    %72 = vector.broadcast %cst_27 : f32 to vector<8x1xf32>
    %73 = arith.addf %69, %72 : vector<8x1xf32>
    %74 = math.rsqrt %73 : vector<8x1xf32>
    %75 = vector.broadcast %74 : vector<8x1xf32> to vector<8x32xf32>
    %76 = arith.mulf %71, %75 : vector<8x32xf32>
    %c0_28 = arith.constant 0 : index
    %c0_29 = arith.constant 0 : index
    %77 = vector.load %arg6[%c0_28, %c0_29] : memref<1x32xf32, #tpu.memory_space<vmem>>, vector<1x32xf32>
    %78 = vector.broadcast %77 : vector<1x32xf32> to vector<8x32xf32>
    %79 = arith.mulf %76, %78 : vector<8x32xf32>
    %c0_30 = arith.constant 0 : index
    %c0_31 = arith.constant 0 : index
    %80 = vector.load %arg7[%c0_30, %c0_31] : memref<1x32xf32, #tpu.memory_space<vmem>>, vector<1x32xf32>
    %81 = vector.broadcast %80 : vector<1x32xf32> to vector<8x32xf32>
    %82 = arith.addf %79, %81 : vector<8x32xf32>
    %83 = arith.truncf %82 : vector<8x32xf32> to vector<8x32xbf16>
    %c0_32 = arith.constant 0 : index
    %c0_33 = arith.constant 0 : index
    %84 = vector.load %arg8[%c0_32, %c0_33] : memref<32x128xbf16, #tpu.memory_space<vmem>>, vector<32x128xbf16>
    %cst_34 = arith.constant dense<0.000000e+00> : vector<8x128xf32>
    %85 = tpu.matmul %83, %84, %cst_34 {dimension_numbers = #tpu.dot_dimension_numbers<[1], [0], [0], [1], [0, 0, 1, 1], [], []>} : vector<8x32xbf16>, vector<32x128xbf16>, vector<8x128xf32> -> vector<8x128xf32>
    %c0_35 = arith.constant 0 : index
    %c0_36 = arith.constant 0 : index
    %86 = vector.load %arg9[%c0_35, %c0_36] : memref<1x128xf32, #tpu.memory_space<vmem>>, vector<1x128xf32>
    %87 = vector.broadcast %86 : vector<1x128xf32> to vector<8x128xf32>
    %88 = arith.addf %85, %87 : vector<8x128xf32>
    %cst_37 = arith.constant 0.000000e+00 : f32
    %89 = vector.broadcast %cst_37 : f32 to vector<8x128xf32>
    %90 = arith.maximumf %88, %89 : vector<8x128xf32>
    %91 = arith.truncf %90 : vector<8x128xf32> to vector<8x128xbf16>
    %c0_38 = arith.constant 0 : index
    %c0_39 = arith.constant 0 : index
    %92 = vector.load %arg10[%c0_38, %c0_39] : memref<128x32xbf16, #tpu.memory_space<vmem>>, vector<128x32xbf16>
    %cst_40 = arith.constant dense<0.000000e+00> : vector<8x32xf32>
    %93 = tpu.matmul %91, %92, %cst_40 {dimension_numbers = #tpu.dot_dimension_numbers<[1], [0], [0], [1], [0, 0, 1, 1], [], []>} : vector<8x128xbf16>, vector<128x32xbf16>, vector<8x32xf32> -> vector<8x32xf32>
    %c0_41 = arith.constant 0 : index
    %c0_42 = arith.constant 0 : index
    %94 = vector.load %arg11[%c0_41, %c0_42] : memref<1x32xf32, #tpu.memory_space<vmem>>, vector<1x32xf32>
    %95 = vector.broadcast %94 : vector<1x32xf32> to vector<8x32xf32>
    %96 = arith.addf %93, %95 : vector<8x32xf32>
    %97 = arith.addf %82, %96 : vector<8x32xf32>
    %cst_43 = arith.constant dense<0.000000e+00> : vector<8xf32>
    %98 = vector.multi_reduction <add>, %97, %cst_43 [1] : vector<8x32xf32> to vector<8xf32>
    %99 = vector.shape_cast %98 : vector<8xf32> to vector<8x1xf32>
    %cst_44 = arith.constant 3.200000e+01 : f32
    %100 = vector.broadcast %cst_44 : f32 to vector<8x1xf32>
    %101 = arith.divf %99, %100 : vector<8x1xf32>
    %102 = vector.broadcast %101 : vector<8x1xf32> to vector<8x32xf32>
    %103 = arith.subf %97, %102 : vector<8x32xf32>
    %104 = arith.mulf %103, %103 : vector<8x32xf32>
    %cst_45 = arith.constant dense<0.000000e+00> : vector<8xf32>
    %105 = vector.multi_reduction <add>, %104, %cst_45 [1] : vector<8x32xf32> to vector<8xf32>
    %106 = vector.shape_cast %105 : vector<8xf32> to vector<8x1xf32>
    %cst_46 = arith.constant 3.200000e+01 : f32
    %107 = vector.broadcast %cst_46 : f32 to vector<8x1xf32>
    %108 = arith.divf %106, %107 : vector<8x1xf32>
    %109 = vector.broadcast %101 : vector<8x1xf32> to vector<8x32xf32>
    %110 = arith.subf %97, %109 : vector<8x32xf32>
    %cst_47 = arith.constant 9.99999974E-6 : f32
    %111 = vector.broadcast %cst_47 : f32 to vector<8x1xf32>
    %112 = arith.addf %108, %111 : vector<8x1xf32>
    %113 = math.rsqrt %112 : vector<8x1xf32>
    %114 = vector.broadcast %113 : vector<8x1xf32> to vector<8x32xf32>
    %115 = arith.mulf %110, %114 : vector<8x32xf32>
    %c0_48 = arith.constant 0 : index
    %c0_49 = arith.constant 0 : index
    %116 = vector.load %arg12[%c0_48, %c0_49] : memref<1x32xf32, #tpu.memory_space<vmem>>, vector<1x32xf32>
    %117 = vector.broadcast %116 : vector<1x32xf32> to vector<8x32xf32>
    %118 = arith.mulf %115, %117 : vector<8x32xf32>
    %c0_50 = arith.constant 0 : index
    %c0_51 = arith.constant 0 : index
    %119 = vector.load %arg13[%c0_50, %c0_51] : memref<1x32xf32, #tpu.memory_space<vmem>>, vector<1x32xf32>
    %120 = vector.broadcast %119 : vector<1x32xf32> to vector<8x32xf32>
    %121 = arith.addf %118, %120 : vector<8x32xf32>
    %122 = arith.truncf %121 : vector<8x32xf32> to vector<8x32xbf16>
    %c0_52 = arith.constant 0 : index
    %c0_53 = arith.constant 0 : index
    %c0_54 = arith.constant 0 : index
    %123 = vector.load %arg14[%c0_52, %c0_53, %c0_54] : memref<1x8x32xbf16, #tpu.memory_space<vmem>>, vector<1x8x32xbf16>
    %124 = vector.shape_cast %123 : vector<1x8x32xbf16> to vector<8x32xbf16>
    %125 = vector.shape_cast %122 : vector<8x32xbf16> to vector<1x8x32xbf16>
    tpu.vector_store %arg14[%c0_52, %c0_53, %c0_54], %125 {strides = array<i32>} : memref<1x8x32xbf16, #tpu.memory_space<vmem>>, vector<1x8x32xbf16>,
    return
  }
  func.func @transform_0(%arg0: i32) -> (i32, i32, i32) {
    %c0_i32 = arith.constant 0 : i32
    %c0_i32_0 = arith.constant 0 : i32
    %c0_i32_1 = arith.constant 0 : i32
    return %arg0, %c0_i32, %c0_i32_0 : i32, i32, i32
  }
  func.func @transform_1(%arg0: i32) -> (i32, i32) {
    %c0_i32 = arith.constant 0 : i32
    %c0_i32_0 = arith.constant 0 : i32
    %c0_i32_1 = arith.constant 0 : i32
    return %c0_i32, %c0_i32_0 : i32, i32
  }
  func.func @transform_2(%arg0: i32) -> (i32, i32) {
    %c0_i32 = arith.constant 0 : i32
    %c0_i32_0 = arith.constant 0 : i32
    %c0_i32_1 = arith.constant 0 : i32
    return %c0_i32, %c0_i32_0 : i32, i32
  }
  func.func @transform_3(%arg0: i32) -> (i32, i32) {
    %c0_i32 = arith.constant 0 : i32
    %c0_i32_0 = arith.constant 0 : i32
    %c0_i32_1 = arith.constant 0 : i32
    return %c0_i32, %c0_i32_0 : i32, i32
  }
  func.func @transform_4(%arg0: i32) -> (i32, i32) {
    %c0_i32 = arith.constant 0 : i32
    %c0_i32_0 = arith.constant 0 : i32
    %c0_i32_1 = arith.constant 0 : i32
    return %c0_i32, %c0_i32_0 : i32, i32
  }
  func.func @transform_5(%arg0: i32) -> (i32, i32) {
    %c0_i32 = arith.constant 0 : i32
    %c0_i32_0 = arith.constant 0 : i32
    %c0_i32_1 = arith.constant 0 : i32
    return %c0_i32, %c0_i32_0 : i32, i32
  }
  func.func @transform_6(%arg0: i32) -> (i32, i32) {
    %c0_i32 = arith.constant 0 : i32
    %c0_i32_0 = arith.constant 0 : i32
    %c0_i32_1 = arith.constant 0 : i32
    return %c0_i32, %c0_i32_0 : i32, i32
  }
  func.func @transform_7(%arg0: i32) -> (i32, i32) {
    %c0_i32 = arith.constant 0 : i32
    %c0_i32_0 = arith.constant 0 : i32
    %c0_i32_1 = arith.constant 0 : i32
    return %c0_i32, %c0_i32_0 : i32, i32
  }
  func.func @transform_8(%arg0: i32) -> (i32, i32) {
    %c0_i32 = arith.constant 0 : i32
    %c0_i32_0 = arith.constant 0 : i32
    %c0_i32_1 = arith.constant 0 : i32
    return %c0_i32, %c0_i32_0 : i32, i32
  }
  func.func @transform_9(%arg0: i32) -> (i32, i32) {
    %c0_i32 = arith.constant 0 : i32
    %c0_i32_0 = arith.constant 0 : i32
    %c0_i32_1 = arith.constant 0 : i32
    return %c0_i32, %c0_i32_0 : i32, i32
  }
  func.func @transform_10(%arg0: i32) -> (i32, i32) {
    %c0_i32 = arith.constant 0 : i32
    %c0_i32_0 = arith.constant 0 : i32
    %c0_i32_1 = arith.constant 0 : i32
    return %c0_i32, %c0_i32_0 : i32, i32
  }
  func.func @transform_11(%arg0: i32) -> (i32, i32) {
    %c0_i32 = arith.constant 0 : i32
    %c0_i32_0 = arith.constant 0 : i32
    %c0_i32_1 = arith.constant 0 : i32
    return %c0_i32, %c0_i32_0 : i32, i32
  }
  func.func @transform_12(%arg0: i32) -> (i32, i32) {
    %c0_i32 = arith.constant 0 : i32
    %c0_i32_0 = arith.constant 0 : i32
    %c0_i32_1 = arith.constant 0 : i32
    return %c0_i32, %c0_i32_0 : i32, i32
  }
  func.func @transform_13(%arg0: i32) -> (i32, i32, i32) {
    %c0_i32 = arith.constant 0 : i32
    %c0_i32_0 = arith.constant 0 : i32
    %c0_i32_1 = arith.constant 0 : i32
    return %arg0, %c0_i32, %c0_i32_0 : i32, i32, i32
  }
}

</mosaic_0001>

<llo_original>
// kernel: tpu_custom_call.1
$region0: #{tpu_custom_call.1}
  #allocation0 [shape = 'u32[]', space=smem, size = 0x4, offset = 0x4, fixed_abs, tag = 'smem constant byte address 0x4 - core index']
  #allocation1 [shape = 'u32[72,128]{1,0:T(1,128)}', space=vmem, size = 0x9000, scoped, tag = 'internal scratch']
  %s0 = inlined_call_operand.vmem [shape: f32[2,8,32], index: 0, kind: input, shape index: {}]
  %s1 = inlined_call_operand.vmem [shape: bf16[32,192], index: 1, kind: input, shape index: {}]
  %s2 = inlined_call_operand.vmem [shape: f32[1,192], index: 2, kind: input, shape index: {}]
  %s3 = inlined_call_operand.vmem [shape: bf16[64,32], index: 3, kind: input, shape index: {}]
  %s4 = inlined_call_operand.vmem [shape: f32[1,32], index: 4, kind: input, shape index: {}]
  %s5 = inlined_call_operand.vmem [shape: f32[1,32], index: 5, kind: input, shape index: {}]
  %s6 = inlined_call_operand.vmem [shape: f32[1,32], index: 6, kind: input, shape index: {}]
  %s7 = inlined_call_operand.vmem [shape: bf16[32,128], index: 7, kind: input, shape index: {}]
  %s8 = inlined_call_operand.vmem [shape: f32[1,128], index: 8, kind: input, shape index: {}]
  %s9 = inlined_call_operand.vmem [shape: bf16[128,32], index: 9, kind: input, shape index: {}]
  %s10 = inlined_call_operand.vmem [shape: f32[1,32], index: 10, kind: input, shape index: {}]
  %s11 = inlined_call_operand.vmem [shape: f32[1,32], index: 11, kind: input, shape index: {}]
  %s12 = inlined_call_operand.vmem [shape: f32[1,32], index: 12, kind: input, shape index: {}]
  %s13 = inlined_call_operand.hbm [shape: bf16[2,8,32], index: 13, kind: output, shape index: {}]
  %s14 = sld [smem:[#allocation0]]
  $region85: #{tpu_custom_call.1} parent=0
    _
  %s16 = ssub.s32 1, %s14
  %s17 = scalar_select 0, %s16, %s14
  $region1: #{tpu_custom_call.1} parent=0
    #allocation2 [shape = 'u8[4096]{0}', space=vmem, size = 0x1000, scoped, tag = 'output window, operand 0']
    #allocation3 [shape = 's32[2]{0}', space=sflag, size = 0x8, scoped, tag = 'scoped memory for tpu_custom_call.1']
    %18 = vsyncpa [#allocation3], 0
    %s19 = scalar_lea.sflag [#allocation3], 1
    %20 = vsyncpa %s19, 0
    loop: start=0, step=1, limit=4
    $region2: #{tpu_custom_call.1} parent=1 // loop_pre_header
      _
    $region3: #{tpu_custom_call.1} parent=1 // loop_header
      %s22 = sphi 0, %s26
      %p23 = scmp.ge.s32.totalorder %s22, 4
      %s32 = sphi 0, %s34
      %s35 = sphi 0, %s32
      %s36 = sphi 0, %s35
      %s52 = sphi 0, %s36
      %s56 = sphi 0, %s56
      %s58 = sphi 0, %s56
      %s59 = sphi 0, %s58
      %s73 = sphi 0, %s59
      %s77 = sphi 0, %s77
      %s79 = sphi 0, %s77
      %s80 = sphi 0, %s79
      %s94 = sphi 0, %s80
      %s98 = sphi 0, %s98
      %s100 = sphi 0, %s98
      %s101 = sphi 0, %s100
      %s115 = sphi 0, %s101
      %s119 = sphi 0, %s119
      %s121 = sphi 0, %s119
      %s122 = sphi 0, %s121
      %s136 = sphi 0, %s122
      %s140 = sphi 0, %s140
      %s142 = sphi 0, %s140
      %s143 = sphi 0, %s142
      %s157 = sphi 0, %s143
      %s161 = sphi 0, %s161
      %s163 = sphi 0, %s161
      %s164 = sphi 0, %s163
      %s178 = sphi 0, %s164
      %s182 = sphi 0, %s182
      %s184 = sphi 0, %s182
      %s185 = sphi 0, %s184
      %s199 = sphi 0, %s185
      %s203 = sphi 0, %s203
      %s205 = sphi 0, %s203
      %s206 = sphi 0, %s205
      %s220 = sphi 0, %s206
      %s224 = sphi 0, %s224
      %s226 = sphi 0, %s224
      %s227 = sphi 0, %s226
      %s241 = sphi 0, %s227
      %s245 = sphi 0, %s245
      %s247 = sphi 0, %s245
      %s248 = sphi 0, %s247
      %s262 = sphi 0, %s248
      %s266 = sphi 0, %s266
      %s268 = sphi 0, %s266
      %s269 = sphi 0, %s268
      %s283 = sphi 0, %s269
      %s287 = sphi 0, %s287
      %s289 = sphi 0, %s287
      %s290 = sphi 0, %s289
      %s304 = sphi 0, %s290
      %s310 = sphi 0, %s312
      %s313 = sphi 0, %s310
      %s314 = sphi 0, %s313
      %s330 = sphi 0, %s314
    $region4: #{tpu_custom_call.1} parent=1 // loop_header_branch
      %25 = sbr.rel (%p23) target = $region8
    $region5: #{tpu_custom_call.1} parent=1 // loop_body
      %s27 = ssub.s32 %s22, 1
      %s28 = ssub.s32 %s22, 2
      %s29 = sadd.s32 %s22, 1
      %s30 = ssub.s32 %s22, %s29
      %p31 = scmp.eq.s32.totalorder %s30, 0
      %s33 = sadd.s32 %s32, 1
      %s34 = scalar_select %p31, %s32, %s33
      %p37 = pneg %p31
      %p38 = scmp.eq.s32.totalorder %s22, 1
      %p39 = por %p37, %p38
      %p40 = scmp.ne.s32.totalorder %s32, %s35
      %p41 = scmp.eq.s32.totalorder %s22, 0
      %p42 = por %p40, %p41
      %p43 = scmp.ne.s32.totalorder %s32, %s35
      %p44 = scmp.eq.s32.totalorder %s27, 1
      %p45 = por %p43, %p44
      %p46 = scmp.ne.s32.totalorder %s35, %s36
      %p47 = scmp.eq.s32.totalorder %s27, 0
      %p48 = por %p46, %p47
      %p49 = scmp.ne.s32.totalorder %s35, %s36
      %p50 = scmp.eq.s32.totalorder %s28, 1
      %p51 = por %p49, %p50
      %p53 = scmp.ne.s32.totalorder %s36, %s52
      %p54 = scmp.eq.s32.totalorder %s28, 0
      %p55 = por %p53, %p54
      %s57 = sadd.s32 %s56, 1
      %p60 = scmp.eq.s32.totalorder %s22, 1
      %p61 = scmp.ne.s32.totalorder %s56, %s58
      %p62 = scmp.eq.s32.totalorder %s22, 0
      %p63 = por %p61, %p62
      %p64 = scmp.ne.s32.totalorder %s56, %s58
      %p65 = scmp.eq.s32.totalorder %s27, 1
      %p66 = por %p64, %p65
      %p67 = scmp.ne.s32.totalorder %s58, %s59
      %p68 = scmp.eq.s32.totalorder %s27, 0
      %p69 = por %p67, %p68
      %p70 = scmp.ne.s32.totalorder %s58, %s59
      %p71 = scmp.eq.s32.totalorder %s28, 1
      %p72 = por %p70, %p71
      %p74 = scmp.ne.s32.totalorder %s59, %s73
      %p75 = scmp.eq.s32.totalorder %s28, 0
      %p76 = por %p74, %p75
      %s78 = sadd.s32 %s77, 1
      %p81 = scmp.eq.s32.totalorder %s22, 1
      %p82 = scmp.ne.s32.totalorder %s77, %s79
      %p83 = scmp.eq.s32.totalorder %s22, 0
      %p84 = por %p82, %p83
      %p85 = scmp.ne.s32.totalorder %s77, %s79
      %p86 = scmp.eq.s32.totalorder %s27, 1
      %p87 = por %p85, %p86
      %p88 = scmp.ne.s32.totalorder %s79, %s80
      %p89 = scmp.eq.s32.totalorder %s27, 0
      %p90 = por %p88, %p89
      %p91 = scmp.ne.s32.totalorder %s79, %s80
      %p92 = scmp.eq.s32.totalorder %s28, 1
      %p93 = por %p91, %p92
      %p95 = scmp.ne.s32.totalorder %s80, %s94
      %p96 = scmp.eq.s32.totalorder %s28, 0
      %p97 = por %p95, %p96
      %s99 = sadd.s32 %s98, 1
      %p102 = scmp.eq.s32.totalorder %s22, 1
      %p103 = scmp.ne.s32.totalorder %s98, %s100
      %p104 = scmp.eq.s32.totalorder %s22, 0
      %p105 = por %p103, %p104
      %p106 = scmp.ne.s32.totalorder %s98, %s100
      %p107 = scmp.eq.s32.totalorder %s27, 1
      %p108 = por %p106, %p107
      %p109 = scmp.ne.s32.totalorder %s100, %s101
      %p110 = scmp.eq.s32.totalorder %s27, 0
      %p111 = por %p109, %p110
      %p112 = scmp.ne.s32.totalorder %s100, %s101
      %p113 = scmp.eq.s32.totalorder %s28, 1
      %p114 = por %p112, %p113
      %p116 = scmp.ne.s32.totalorder %s101, %s115
      %p117 = scmp.eq.s32.totalorder %s28, 0
      %p118 = por %p116, %p117
      %s120 = sadd.s32 %s119, 1
      %p123 = scmp.eq.s32.totalorder %s22, 1
      %p124 = scmp.ne.s32.totalorder %s119, %s121
      %p125 = scmp.eq.s32.totalorder %s22, 0
      %p126 = por %p124, %p125
      %p127 = scmp.ne.s32.totalorder %s119, %s121
      %p128 = scmp.eq.s32.totalorder %s27, 1
      %p129 = por %p127, %p128
      %p130 = scmp.ne.s32.totalorder %s121, %s122
      %p131 = scmp.eq.s32.totalorder %s27, 0
      %p132 = por %p130, %p131
      %p133 = scmp.ne.s32.totalorder %s121, %s122
      %p134 = scmp.eq.s32.totalorder %s28, 1
      %p135 = por %p133, %p134
      %p137 = scmp.ne.s32.totalorder %s122, %s136
      %p138 = scmp.eq.s32.totalorder %s28, 0
      %p139 = por %p137, %p138
      %s141 = sadd.s32 %s140, 1
      %p144 = scmp.eq.s32.totalorder %s22, 1
      %p145 = scmp.ne.s32.totalorder %s140, %s142
      %p146 = scmp.eq.s32.totalorder %s22, 0
      %p147 = por %p145, %p146
      %p148 = scmp.ne.s32.totalorder %s140, %s142
      %p149 = scmp.eq.s32.totalorder %s27, 1
      %p150 = por %p148, %p149
      %p151 = scmp.ne.s32.totalorder %s142, %s143
      %p152 = scmp.eq.s32.totalorder %s27, 0
      %p153 = por %p151, %p152
      %p154 = scmp.ne.s32.totalorder %s142, %s143
      %p155 = scmp.eq.s32.totalorder %s28, 1
      %p156 = por %p154, %p155
      %p158 = scmp.ne.s32.totalorder %s143, %s157
      %p159 = scmp.eq.s32.totalorder %s28, 0
      %p160 = por %p158, %p159
      %s162 = sadd.s32 %s161, 1
      %p165 = scmp.eq.s32.totalorder %s22, 1
      %p166 = scmp.ne.s32.totalorder %s161, %s163
      %p167 = scmp.eq.s32.totalorder %s22, 0
      %p168 = por %p166, %p167
      %p169 = scmp.ne.s32.totalorder %s161, %s163
      %p170 = scmp.eq.s32.totalorder %s27, 1
      %p171 = por %p169, %p170
      %p172 = scmp.ne.s32.totalorder %s163, %s164
      %p173 = scmp.eq.s32.totalorder %s27, 0
      %p174 = por %p172, %p173
      %p175 = scmp.ne.s32.totalorder %s163, %s164
      %p176 = scmp.eq.s32.totalorder %s28, 1
      %p177 = por %p175, %p176
      %p179 = scmp.ne.s32.totalorder %s164, %s178
      %p180 = scmp.eq.s32.totalorder %s28, 0
      %p181 = por %p179, %p180
      %s183 = sadd.s32 %s182, 1
      %p186 = scmp.eq.s32.totalorder %s22, 1
      %p187 = scmp.ne.s32.totalorder %s182, %s184
      %p188 = scmp.eq.s32.totalorder %s22, 0
      %p189 = por %p187, %p188
      %p190 = scmp.ne.s32.totalorder %s182, %s184
      %p191 = scmp.eq.s32.totalorder %s27, 1
      %p192 = por %p190, %p191
      %p193 = scmp.ne.s32.totalorder %s184, %s185
      %p194 = scmp.eq.s32.totalorder %s27, 0
      %p195 = por %p193, %p194
      %p196 = scmp.ne.s32.totalorder %s184, %s185
      %p197 = scmp.eq.s32.totalorder %s28, 1
      %p198 = por %p196, %p197
      %p200 = scmp.ne.s32.totalorder %s185, %s199
      %p201 = scmp.eq.s32.totalorder %s28, 0
      %p202 = por %p200, %p201
      %s204 = sadd.s32 %s203, 1
      %p207 = scmp.eq.s32.totalorder %s22, 1
      %p208 = scmp.ne.s32.totalorder %s203, %s205
      %p209 = scmp.eq.s32.totalorder %s22, 0
      %p210 = por %p208, %p209
      %p211 = scmp.ne.s32.totalorder %s203, %s205
      %p212 = scmp.eq.s32.totalorder %s27, 1
      %p213 = por %p211, %p212
      %p214 = scmp.ne.s32.totalorder %s205, %s206
      %p215 = scmp.eq.s32.totalorder %s27, 0
      %p216 = por %p214, %p215
      %p217 = scmp.ne.s32.totalorder %s205, %s206
      %p218 = scmp.eq.s32.totalorder %s28, 1
      %p219 = por %p217, %p218
      %p221 = scmp.ne.s32.totalorder %s206, %s220
      %p222 = scmp.eq.s32.totalorder %s28, 0
      %p223 = por %p221, %p222
      %s225 = sadd.s32 %s224, 1
      %p228 = scmp.eq.s32.totalorder %s22, 1
      %p229 = scmp.ne.s32.totalorder %s224, %s226
      %p230 = scmp.eq.s32.totalorder %s22, 0
      %p231 = por %p229, %p230
      %p232 = scmp.ne.s32.totalorder %s224, %s226
      %p233 = scmp.eq.s32.totalorder %s27, 1
      %p234 = por %p232, %p233
      %p235 = scmp.ne.s32.totalorder %s226, %s227
      %p236 = scmp.eq.s32.totalorder %s27, 0
      %p237 = por %p235, %p236
      %p238 = scmp.ne.s32.totalorder %s226, %s227
      %p239 = scmp.eq.s32.totalorder %s28, 1
      %p240 = por %p238, %p239
      %p242 = scmp.ne.s32.totalorder %s227, %s241
      %p243 = scmp.eq.s32.totalorder %s28, 0
      %p244 = por %p242, %p243
      %s246 = sadd.s32 %s245, 1
      %p249 = scmp.eq.s32.totalorder %s22, 1
      %p250 = scmp.ne.s32.totalorder %s245, %s247
      %p251 = scmp.eq.s32.totalorder %s22, 0
      %p252 = por %p250, %p251
      %p253 = scmp.ne.s32.totalorder %s245, %s247
      %p254 = scmp.eq.s32.totalorder %s27, 1
      %p255 = por %p253, %p254
      %p256 = scmp.ne.s32.totalorder %s247, %s248
      %p257 = scmp.eq.s32.totalorder %s27, 0
      %p258 = por %p256, %p257
      %p259 = scmp.ne.s32.totalorder %s247, %s248
      %p260 = scmp.eq.s32.totalorder %s28, 1
      %p261 = por %p259, %p260
      %p263 = scmp.ne.s32.totalorder %s248, %s262
      %p264 = scmp.eq.s32.totalorder %s28, 0
      %p265 = por %p263, %p264
      %s267 = sadd.s32 %s266, 1
      %p270 = scmp.eq.s32.totalorder %s22, 1
      %p271 = scmp.ne.s32.totalorder %s266, %s268
      %p272 = scmp.eq.s32.totalorder %s22, 0
      %p273 = por %p271, %p272
      %p274 = scmp.ne.s32.totalorder %s266, %s268
      %p275 = scmp.eq.s32.totalorder %s27, 1
      %p276 = por %p274, %p275
      %p277 = scmp.ne.s32.totalorder %s268, %s269
      %p278 = scmp.eq.s32.totalorder %s27, 0
      %p279 = por %p277, %p278
      %p280 = scmp.ne.s32.totalorder %s268, %s269
      %p281 = scmp.eq.s32.totalorder %s28, 1
      %p282 = por %p280, %p281
      %p284 = scmp.ne.s32.totalorder %s269, %s283
      %p285 = scmp.eq.s32.totalorder %s28, 0
      %p286 = por %p284, %p285
      %s288 = sadd.s32 %s287, 1
      %p291 = scmp.eq.s32.totalorder %s22, 1
      %p292 = scmp.ne.s32.totalorder %s287, %s289
      %p293 = scmp.eq.s32.totalorder %s22, 0
      %p294 = por %p292, %p293
      %p295 = scmp.ne.s32.totalorder %s287, %s289
      %p296 = scmp.eq.s32.totalorder %s27, 1
      %p297 = por %p295, %p296
      %p298 = scmp.ne.s32.totalorder %s289, %s290
      %p299 = scmp.eq.s32.totalorder %s27, 0
      %p300 = por %p298, %p299
      %p301 = scmp.ne.s32.totalorder %s289, %s290
      %p302 = scmp.eq.s32.totalorder %s28, 1
      %p303 = por %p301, %p302
      %p305 = scmp.ne.s32.totalorder %s290, %s304
      %p306 = scmp.eq.s32.totalorder %s28, 0
      %p307 = por %p305, %p306
      %s308 = ssub.s32 %s22, %s29
      %p309 = scmp.eq.s32.totalorder %s308, 0
      %s311 = sadd.s32 %s310, 1
      %s312 = scalar_select %p309, %s310, %s311
      %p315 = pneg %p309
      %p316 = scmp.eq.s32.totalorder %s22, 1
      %p317 = por %p315, %p316
      %p318 = scmp.ne.s32.totalorder %s310, %s313
      %p319 = scmp.eq.s32.totalorder %s22, 0
      %p320 = por %p318, %p319
      %p321 = scmp.ne.s32.totalorder %s310, %s313
      %p322 = scmp.eq.s32.totalorder %s27, 1
      %p323 = por %p321, %p322
      %p324 = scmp.ne.s32.totalorder %s313, %s314
      %p325 = scmp.eq.s32.totalorder %s27, 0
      %p326 = por %p324, %p325
      %p327 = scmp.ne.s32.totalorder %s313, %s314
      %p328 = scmp.eq.s32.totalorder %s28, 1
      %p329 = por %p327, %p328
      %p331 = scmp.ne.s32.totalorder %s314, %s330
      %p332 = scmp.eq.s32.totalorder %s28, 0
      %p333 = por %p331, %p332
      %p334 = scmp.le.s32.totalorder 1, %s22
      %p335 = scmp.lt.s32.totalorder %s22, 3
      %p336 = pnand %p334, %p335
      %p337 = pneg %p336
      // Predicated region
      $region9: #{tpu_custom_call.1} parent=5 // pred_check
        _
      $region10: #{tpu_custom_call.1} parent=5 // pred_check_branch
        %339 = sbr.rel (%p336) target = $region12
      $region11: #{tpu_custom_call.1} parent=5 // pred_region
        %s340 = ssub.s32 %s22, 1
        // Predicated region
        $region13: #{tpu_custom_call.1} parent=11 // pred_check
          %p341 = pneg %p69
        $region14: #{tpu_custom_call.1} parent=11 // pred_check_branch
          %343 = sbr.rel (%p341) target = $region16
        $region15: #{tpu_custom_call.1} parent=11 // pred_region
          _
        $region16: #{tpu_custom_call.1} parent=11 // pred_fallthru
          _
        // Predicated region
        $region17: #{tpu_custom_call.1} parent=11 // pred_check
          %p344 = pneg %p90
        $region18: #{tpu_custom_call.1} parent=11 // pred_check_branch
          %346 = sbr.rel (%p344) target = $region20
        $region19: #{tpu_custom_call.1} parent=11 // pred_region
          _
        $region20: #{tpu_custom_call.1} parent=11 // pred_fallthru
          _
        // Predicated region
        $region21: #{tpu_custom_call.1} parent=11 // pred_check
          %p347 = pneg %p111
        $region22: #{tpu_custom_call.1} parent=11 // pred_check_branch
          %349 = sbr.rel (%p347) target = $region24
        $region23: #{tpu_custom_call.1} parent=11 // pred_region
          _
        $region24: #{tpu_custom_call.1} parent=11 // pred_fallthru
          _
        // Predicated region
        $region25: #{tpu_custom_call.1} parent=11 // pred_check
          %p350 = pneg %p132
        $region26: #{tpu_custom_call.1} parent=11 // pred_check_branch
          %352 = sbr.rel (%p350) target = $region28
        $region27: #{tpu_custom_call.1} parent=11 // pred_region
          _
        $region28: #{tpu_custom_call.1} parent=11 // pred_fallthru
          _
        // Predicated region
        $region29: #{tpu_custom_call.1} parent=11 // pred_check
          %p353 = pneg %p153
        $region30: #{tpu_custom_call.1} parent=11 // pred_check_branch
          %355 = sbr.rel (%p353) target = $region32
        $region31: #{tpu_custom_call.1} parent=11 // pred_region
          _
        $region32: #{tpu_custom_call.1} parent=11 // pred_fallthru
          _
        // Predicated region
        $region33: #{tpu_custom_call.1} parent=11 // pred_check
          %p356 = pneg %p174
        $region34: #{tpu_custom_call.1} parent=11 // pred_check_branch
          %358 = sbr.rel (%p356) target = $region36
        $region35: #{tpu_custom_call.1} parent=11 // pred_region
          _
        $region36: #{tpu_custom_call.1} parent=11 // pred_fallthru
          _
        // Predicated region
        $region37: #{tpu_custom_call.1} parent=11 // pred_check
          %p359 = pneg %p195
        $region38: #{tpu_custom_call.1} parent=11 // pred_check_branch
          %361 = sbr.rel (%p359) target = $region40
        $region39: #{tpu_custom_call.1} parent=11 // pred_region
          _
        $region40: #{tpu_custom_call.1} parent=11 // pred_fallthru
          _
        // Predicated region
        $region41: #{tpu_custom_call.1} parent=11 // pred_check
          %p362 = pneg %p216
        $region42: #{tpu_custom_call.1} parent=11 // pred_check_branch
          %364 = sbr.rel (%p362) target = $region44
        $region43: #{tpu_custom_call.1} parent=11 // pred_region
          _
        $region44: #{tpu_custom_call.1} parent=11 // pred_fallthru
          _
        // Predicated region
        $region45: #{tpu_custom_call.1} parent=11 // pred_check
          %p365 = pneg %p237
        $region46: #{tpu_custom_call.1} parent=11 // pred_check_branch
          %367 = sbr.rel (%p365) target = $region48
        $region47: #{tpu_custom_call.1} parent=11 // pred_region
          _
        $region48: #{tpu_custom_call.1} parent=11 // pred_fallthru
          _
        // Predicated region
        $region49: #{tpu_custom_call.1} parent=11 // pred_check
          %p368 = pneg %p258
        $region50: #{tpu_custom_call.1} parent=11 // pred_check_branch
          %370 = sbr.rel (%p368) target = $region52
        $region51: #{tpu_custom_call.1} parent=11 // pred_region
          _
        $region52: #{tpu_custom_call.1} parent=11 // pred_fallthru
          _
        // Predicated region
        $region53: #{tpu_custom_call.1} parent=11 // pred_check
          %p371 = pneg %p279
        $region54: #{tpu_custom_call.1} parent=11 // pred_check_branch
          %373 = sbr.rel (%p371) target = $region56
        $region55: #{tpu_custom_call.1} parent=11 // pred_region
          _
        $region56: #{tpu_custom_call.1} parent=11 // pred_fallthru
          _
        // Predicated region
        $region57: #{tpu_custom_call.1} parent=11 // pred_check
          %p374 = pneg %p300
        $region58: #{tpu_custom_call.1} parent=11 // pred_check_branch
          %376 = sbr.rel (%p374) target = $region60
        $region59: #{tpu_custom_call.1} parent=11 // pred_region
          _
        $region60: #{tpu_custom_call.1} parent=11 // pred_fallthru
          _
      $region12: #{tpu_custom_call.1} parent=5 // pred_fallthru
        _
      %p377 = scmp.lt.s32.totalorder %s22, 2
      // Predicated region
      $region61: #{tpu_custom_call.1} parent=5 // pred_check
        %p378 = pneg %p377
      $region62: #{tpu_custom_call.1} parent=5 // pred_check_branch
        %380 = sbr.rel (%p378) target = $region64
      $region63: #{tpu_custom_call.1} parent=5 // pred_region
        // Predicated region
        $region65: #{tpu_custom_call.1} parent=63 // pred_check
          %p381 = pneg %p42
        $region66: #{tpu_custom_call.1} parent=63 // pred_check_branch
          %383 = sbr.rel (%p381) target = $region68
        $region67: #{tpu_custom_call.1} parent=63 // pred_region
          %p384 = scmp.lt.s32.totalorder %s22, 1
          %s385 = scalar_select %p384, %s22, 1
          %s386 = smul.addr %s385, 8
          %s387 = scalar_lea.vmem %s0, %s386
        $region68: #{tpu_custom_call.1} parent=63 // pred_fallthru
          _
      $region64: #{tpu_custom_call.1} parent=5 // pred_fallthru
        _
      %p388 = scmp.le.s32.totalorder 1, %s22
      %p389 = scmp.lt.s32.totalorder %s22, 3
      %p390 = pnand %p388, %p389
      %p391 = pneg %p390
      // Predicated region
      $region69: #{tpu_custom_call.1} parent=5 // pred_check
        _
      $region70: #{tpu_custom_call.1} parent=5 // pred_check_branch
        %393 = sbr.rel (%p390) target = $region72
      $region71: #{tpu_custom_call.1} parent=5 // pred_region
        %s394 = ssub.s32 %s22, 1
        %p395 = scmp.lt.s32.totalorder %s27, 1
        %s396 = scalar_select %p395, %s27, 1
        %s397 = smul.addr %s396, 8
        %s398 = scalar_lea.vmem %s0, %s397
        %p399 = pneg %p48
        %p400 = pneg %p45
        %p401 = pneg %p69
        %p402 = pneg %p66
        %p403 = pneg %p90
        %p404 = pneg %p87
        %p405 = pneg %p111
        %p406 = pneg %p108
        %p407 = pneg %p132
        %p408 = pneg %p129
        %p409 = pneg %p153
        %p410 = pneg %p150
        %p411 = pneg %p174
        %p412 = pneg %p171
        %p413 = pneg %p195
        %p414 = pneg %p192
        %p415 = pneg %p216
        %p416 = pneg %p213
        %p417 = pneg %p237
        %p418 = pneg %p234
        %p419 = pneg %p258
        %p420 = pneg %p255
        %p421 = pneg %p279
        %p422 = pneg %p276
        %p423 = pneg %p300
        %p424 = pneg %p297
        %p425 = pneg %p326
        %p426 = pneg %p323
        %s427 = sand.u32 %s313, 1
        %s428 = scalar_lea.sflag [#allocation3], %s427
        %s429 = sand.u32 %s313, 1
        %s430 = smul.addr %s429, 4
        %s431 = scalar_lea.vmem [#allocation2], %s430
        %p432 = scmp.lt.s32.totalorder %s27, 1
        %s433 = scalar_select %p432, %s27, 1
        %s434 = smul.addr %s433, 8
        %s435 = scalar_lea.vmem %s0, %s434
        %v437 = vld [vmem:[%s435] sm:$0xff]
        %v438 = vpack.c.bf16 %v437, %v437
        %v439 = vld [vmem:[%s1] sm:$0xff]
        %v440 = vld [vmem:[%s1 + $0x8] sm:$0xff]
        %v441 = vld [vmem:[%s1 + $0x10] sm:$0xff]
        %v442 = vld [vmem:[%s1 + $0x18] sm:$0xff]
        %v443 = vld [vmem:[%s2] sm:$0x3]
        %v445 = vperm.slane %v443, 0
        %v446 = vperm.slane %v443, 1
        %v453 = vunpack.c.l.b16 %v439
        %v454 = vunpack.c.h.b16 %v439
        %v455 = vunpack.c.l.b16 %v440
        %v456 = vunpack.c.h.b16 %v440
        %v457 = vunpack.c.l.b16 %v441
        %v458 = vunpack.c.h.b16 %v441
        %v459 = vunpack.c.l.b16 %v442
        %v460 = vunpack.c.h.b16 %v442
        %v461 = vpack.c.b16 %v455, %v453
        %v462 = vpack.c.b16 %v456, %v454
        %v463 = vpack.c.b16 %v459, %v457
        %v464 = vpack.c.b16 %v460, %v458
        %vm469 = vcmask 261120
        %v471 = vsel %vm469, %v438, 0
        %473 = vmatpush.bf16.msra.mxu0 0
        %474 = vmatpush.bf16.msra.mxu0 0
        %475 = vmatpush.bf16.msra.mxu0 0
        %476 = vmatpush.bf16.msra.mxu0 0
        %477 = vmatpush.bf16.msra.mxu0 0
        %478 = vmatpush.bf16.msra.mxu0 0
        %479 = vmatpush.bf16.msra.mxu0 %v463
        %480 = vmatpush.bf16.msra.mxu0 %v461
        %481 = vmatmul.bf16.gmra.mxu0 %v471
        %v482 = vpop.f32.mrf.mxu0
        %v483 = vadd.f32 %v445, %v482
        %v484 = vpop.f32.mrf.mxu0
        %485 = vdwg.mxu0
        %486 = vmatpush.bf16.msra.mxu0 0
        %487 = vmatpush.bf16.msra.mxu0 0
        %488 = vmatpush.bf16.msra.mxu0 0
        %489 = vmatpush.bf16.msra.mxu0 0
        %490 = vmatpush.bf16.msra.mxu0 0
        %491 = vmatpush.bf16.msra.mxu0 0
        %492 = vmatpush.bf16.msra.mxu0 %v464
        %493 = vmatpush.bf16.msra.mxu0 %v462
        %494 = vmatmul.bf16.gmra.mxu0 %v471
        %v495 = vpop.f32.mrf.mxu0
        %v496 = vadd.f32 %v446, %v495
        %v497 = vpop.f32.mrf.mxu0
        %498 = vdwg.mxu0
        %v499 = vpack.c.bf16 %v496, %v483
        %v500 = vlaneseq
        %v501 = vshrl.u32 %v500, 7
        %v502 = vlaneseq
        %v503 = vand.u32 %v502, 127
        %vm504 = vcmp.le.s32.totalorder %v503, %v501
        %v506 = vunpack.c.l.b16 %v499
        %v507 = vpack.c.b16 %v506, %v506
        %508 = vrot.lane.b32.xlu0 %v507, 64
        %v509 = vpop.permute.xlu0 %508
        %v511 = vsel %vm469, %v499, 0
        %v514 = vsel %vm469, %v509, 0
        %516 = vmatpush.bf16.xpose.msra.mxu0 0
        %517 = vmatpush.bf16.xpose.msra.mxu0 0
        %518 = vmatpush.bf16.xpose.msra.mxu0 0
        %519 = vmatpush.bf16.xpose.msra.mxu0 0
        %520 = vmatpush.bf16.xpose.msra.mxu0 0
        %521 = vmatpush.bf16.xpose.msra.mxu0 0
        %522 = vmatpush.bf16.xpose.msra.mxu0 0
        %523 = vmatpush.bf16.xpose.msra.mxu0 %v514
        %524 = vmatmul.bf16.gmra.mxu0 %v511
        %v525 = vpop.f32.mrf.mxu0
        %v526 = vadd.f32 0.0, %v525
        %v527 = vpop.f32.mrf.mxu0
        %528 = vdwg.mxu0
        %v529 = vsel %vm504, %v526, -1e+09
        %vm530 = vcmask 64512
        %v531 = vsel %vm530, %v529, -inf
        %532 = vmax.xlane.f32.xlu0 %v531
        %v533 = vpop.xlane.xlu0 %532
        %v534 = vsub.f32 %v529, %v533
        %v535 = vmul.f32 %v534, 1.442695
        %v536 = vpow.pop %v535
        %v537 = vsel %vm530, %v536, 0.0
        %538 = vadd.xlane.f32.xlu0 %v537
        %v539 = vpop.xlane.xlu0 %538
        %v540 = vrcp.pop %v539
        %v541 = vmul.f32 %v536, %v540
        %v542 = vpack.c.bf16 %v541, %v541
        %v543 = vunpack.c.h.b16 %v499
        %v544 = vpack.c.b16 %v543, %v543
        %v546 = vsel %vm530, %v542, 0
        %vm548 = vcmask 1043456
        %v550 = vsel %vm548, %v544, 0
        %552 = vmatpush.bf16.msra.mxu0 0
        %553 = vmatpush.bf16.msra.mxu0 0
        %554 = vmatpush.bf16.msra.mxu0 0
        %555 = vmatpush.bf16.msra.mxu0 0
        %556 = vmatpush.bf16.msra.mxu0 0
        %557 = vmatpush.bf16.msra.mxu0 0
        %558 = vmatpush.bf16.msra.mxu0 0
        %559 = vmatpush.bf16.msra.mxu0 %v550
        %560 = vmatmul.bf16.gmra.mxu0 %v546
        %v561 = vpop.f32.mrf.mxu0
        %v562 = vadd.f32 0.0, %v561
        %v563 = vpop.f32.mrf.mxu0
        %564 = vdwg.mxu0
        %v565 = vpack.c.bf16 %v562, %v562
        %v566 = vld [vmem:[%s3] sm:$0xf]
        %v567 = vld [vmem:[%s3 + $0x4] sm:$0xf]
        %v568 = vld [vmem:[%s3 + $0x8] sm:$0xf]
        %v569 = vld [vmem:[%s3 + $0xc] sm:$0xf]
        %570 = vrot.lane.b32.xlu0 %v507, 96
        %v571 = vpop.permute.xlu0 %570
        %572 = vrot.lane.b32.xlu0 %v507, 32
        %v573 = vpop.permute.xlu0 %572
        %v575 = vsel %vm469, %v571, 0
        %v578 = vsel %vm469, %v573, 0
        %580 = vmatpush.bf16.xpose.msra.mxu0 0
        %581 = vmatpush.bf16.xpose.msra.mxu0 0
        %582 = vmatpush.bf16.xpose.msra.mxu0 0
        %583 = vmatpush.bf16.xpose.msra.mxu0 0
        %584 = vmatpush.bf16.xpose.msra.mxu0 0
        %585 = vmatpush.bf16.xpose.msra.mxu0 0
        %586 = vmatpush.bf16.xpose.msra.mxu0 0
        %587 = vmatpush.bf16.xpose.msra.mxu0 %v578
        %588 = vmatmul.bf16.gmra.mxu0 %v575
        %v589 = vpop.f32.mrf.mxu0
        %v590 = vadd.f32 0.0, %v589
        %v591 = vpop.f32.mrf.mxu0
        %592 = vdwg.mxu0
        %v593 = vsel %vm504, %v590, -1e+09
        %v594 = vsel %vm530, %v593, -inf
        %595 = vmax.xlane.f32.xlu0 %v594
        %v596 = vpop.xlane.xlu0 %595
        %v597 = vsub.f32 %v593, %v596
        %v598 = vmul.f32 %v597, 1.442695
        %v599 = vpow.pop %v598
        %v600 = vsel %vm530, %v599, 0.0
        %601 = vadd.xlane.f32.xlu0 %v600
        %v602 = vpop.xlane.xlu0 %601
        %v603 = vrcp.pop %v602
        %v604 = vmul.f32 %v599, %v603
        %v605 = vpack.c.bf16 %v604, %v604
        %606 = vrot.lane.b32.xlu0 %v544, 96
        %v607 = vpop.permute.xlu0 %606
        %v609 = vsel %vm530, %v605, 0
        %v612 = vsel %vm548, %v607, 0
        %614 = vmatpush.bf16.msra.mxu0 0
        %615 = vmatpush.bf16.msra.mxu0 0
        %616 = vmatpush.bf16.msra.mxu0 0
        %617 = vmatpush.bf16.msra.mxu0 0
        %618 = vmatpush.bf16.msra.mxu0 0
        %619 = vmatpush.bf16.msra.mxu0 0
        %620 = vmatpush.bf16.msra.mxu0 0
        %621 = vmatpush.bf16.msra.mxu0 %v612
        %622 = vmatmul.bf16.gmra.mxu0 %v609
        %v623 = vpop.f32.mrf.mxu0
        %v624 = vadd.f32 0.0, %v623
        %v625 = vpop.f32.mrf.mxu0
        %626 = vdwg.mxu0
        %v627 = vpack.c.bf16 %v624, %v624
        %v628 = vld [vmem:[%s3 + $0x10] sm:$0xf]
        %v629 = vld [vmem:[%s3 + $0x14] sm:$0xf]
        %v630 = vld [vmem:[%s3 + $0x18] sm:$0xf]
        %v631 = vld [vmem:[%s3 + $0x1c] sm:$0xf]
        %v636 = vunpack.c.l.b16 %v628
        %v637 = vunpack.c.l.b16 %v629
        %v638 = vunpack.c.l.b16 %v630
        %v639 = vunpack.c.l.b16 %v631
        %v640 = vpack.c.b16 %v637, %v636
        %v641 = vpack.c.b16 %v639, %v638
        %v645 = vsel %vm469, %v627, 0
        %647 = vmatpush.bf16.msra.mxu0 0
        %648 = vmatpush.bf16.msra.mxu0 0
        %649 = vmatpush.bf16.msra.mxu0 0
        %650 = vmatpush.bf16.msra.mxu0 0
        %651 = vmatpush.bf16.msra.mxu0 0
        %652 = vmatpush.bf16.msra.mxu0 0
        %653 = vmatpush.bf16.msra.mxu0 %v641
        %654 = vmatpush.bf16.msra.mxu0 %v640
        %655 = vmatmul.bf16.gmra.mxu0 %v645
        %v656 = vpop.f32.mrf.mxu0
        %v657 = vadd.f32 0.0, %v656
        %v658 = vpop.f32.mrf.mxu0
        %659 = vdwg.mxu0
        %v664 = vunpack.c.l.b16 %v566
        %v665 = vunpack.c.l.b16 %v567
        %v666 = vunpack.c.l.b16 %v568
        %v667 = vunpack.c.l.b16 %v569
        %v668 = vpack.c.b16 %v665, %v664
        %v669 = vpack.c.b16 %v667, %v666
        %v673 = vsel %vm469, %v565, 0
        %675 = vmatpush.bf16.msra.mxu0 0
        %676 = vmatpush.bf16.msra.mxu0 0
        %677 = vmatpush.bf16.msra.mxu0 0
        %678 = vmatpush.bf16.msra.mxu0 0
        %679 = vmatpush.bf16.msra.mxu0 0
        %680 = vmatpush.bf16.msra.mxu0 0
        %681 = vmatpush.bf16.msra.mxu0 %v669
        %682 = vmatpush.bf16.msra.mxu0 %v668
        %683 = vmatmul.bf16.gmra.mxu0 %v673
        %v684 = vpop.f32.mrf.mxu0
        %v685 = vadd.f32 %v657, %v684
        %v686 = vpop.f32.mrf.mxu0
        %687 = vdwg.mxu0
        %v688 = vld [vmem:[%s4] sm:$0x1]
        %v690 = vperm.slane %v688, 0
        %v692 = vadd.f32 %v685, %v690
        %v693 = vadd.f32 %v437, %v692
        %v694 = vsel %vm469, %v693, 0.0
        %695 = vadd.xlane.f32.xlu0 %v694
        %v696 = vpop.xlane.xlu0 %695
        %v697 = vrcp.pop 32.0
        %v698 = vmul.f32 32.0, %v697
        %v699 = vsub.f32 1.0, %v698
        %v700 = vmul.f32 %v697, %v699
        %v701 = vadd.f32 %v697, %v700
        %vm702 = vweird.f32 %v697
        %v703 = vsel %vm702, %v697, %v701
        %v704 = vmul.f32 %v696, %v703
        %v705 = vsub.f32 %v693, %v704
        %v706 = vmul.f32 %v705, %v705
        %v707 = vsel %vm469, %v706, 0.0
        %708 = vadd.xlane.f32.xlu0 %v707
        %v709 = vpop.xlane.xlu0 %708
        %v710 = vmul.f32 %v709, %v703
        %v711 = vadd.f32 %v710, 1e-05
        %v712 = vrsqrt.pop %v711
        %v713 = vmul.f32 %v712, %v711
        %v714 = vmul.f32 %v713, %v712
        %v715 = vmul.f32 0.5, %v714
        %v716 = vsub.f32 1.5, %v715
        %v717 = vmul.f32 %v712, %v716
        %vm718 = vweird.f32 %v711
        %vm719 = vweird.f32 %v712
        %vm720 = vmor %vm718, %vm719
        %v721 = vsel %vm720, %v712, %v717
        %v722 = vmul.f32 %v705, %v721
        %v723 = vld [vmem:[%s5] sm:$0x1]
        %v725 = vperm.slane %v723, 0
        %v727 = vmul.f32 %v722, %v725
        %v728 = vld [vmem:[%s6] sm:$0x1]
        %v730 = vperm.slane %v728, 0
        %v732 = vadd.f32 %v727, %v730
        %v733 = vpack.c.bf16 %v732, %v732
        %v734 = vld [vmem:[%s7] sm:$0xf]
        %v735 = vld [vmem:[%s7 + $0x4] sm:$0xf]
        %v736 = vld [vmem:[%s7 + $0x8] sm:$0xf]
        %v737 = vld [vmem:[%s7 + $0xc] sm:$0xf]
        %v738 = vld [vmem:[%s8] sm:$0x1]
        %v740 = vperm.slane %v738, 0
        %v746 = vunpack.c.l.b16 %v734
        %v747 = vunpack.c.l.b16 %v735
        %v748 = vunpack.c.l.b16 %v736
        %v749 = vunpack.c.l.b16 %v737
        %v750 = vpack.c.b16 %v747, %v746
        %v751 = vpack.c.b16 %v749, %v748
        %v755 = vsel %vm469, %v733, 0
        %757 = vmatpush.bf16.msra.mxu0 0
        %758 = vmatpush.bf16.msra.mxu0 0
        %759 = vmatpush.bf16.msra.mxu0 0
        %760 = vmatpush.bf16.msra.mxu0 0
        %761 = vmatpush.bf16.msra.mxu0 0
        %762 = vmatpush.bf16.msra.mxu0 0
        %763 = vmatpush.bf16.msra.mxu0 %v751
        %764 = vmatpush.bf16.msra.mxu0 %v750
        %765 = vmatmul.bf16.gmra.mxu0 %v755
        %v766 = vpop.f32.mrf.mxu0
        %v767 = vadd.f32 %v740, %v766
        %v768 = vpop.f32.mrf.mxu0
        %769 = vdwg.mxu0
        %v770 = vmax.f32 %v767, 0.0
        %v771 = vpack.c.bf16 %v770, %v770
        %v772 = vld [vmem:[%s9] sm:$0xf]
        %v773 = vld [vmem:[%s9 + $0x4] sm:$0xf]
        %v774 = vld [vmem:[%s9 + $0x8] sm:$0xf]
        %v775 = vld [vmem:[%s9 + $0xc] sm:$0xf]
        %v776 = vld [vmem:[%s9 + $0x10] sm:$0xf]
        %v777 = vld [vmem:[%s9 + $0x14] sm:$0xf]
        %v778 = vld [vmem:[%s9 + $0x18] sm:$0xf]
        %v779 = vld [vmem:[%s9 + $0x1c] sm:$0xf]
        %v780 = vld [vmem:[%s9 + $0x20] sm:$0xf]
        %v781 = vld [vmem:[%s9 + $0x24] sm:$0xf]
        %v782 = vld [vmem:[%s9 + $0x28] sm:$0xf]
        %v783 = vld [vmem:[%s9 + $0x2c] sm:$0xf]
        %v784 = vld [vmem:[%s9 + $0x30] sm:$0xf]
        %v785 = vld [vmem:[%s9 + $0x34] sm:$0xf]
        %v786 = vld [vmem:[%s9 + $0x38] sm:$0xf]
        %v787 = vld [vmem:[%s9 + $0x3c] sm:$0xf]
        %v788 = vld [vmem:[%s10] sm:$0x1]
        %v790 = vperm.slane %v788, 0
        %v808 = vunpack.c.l.b16 %v772
        %v809 = vunpack.c.l.b16 %v773
        %v810 = vunpack.c.l.b16 %v774
        %v811 = vunpack.c.l.b16 %v775
        %v812 = vunpack.c.l.b16 %v776
        %v813 = vunpack.c.l.b16 %v777
        %v814 = vunpack.c.l.b16 %v778
        %v815 = vunpack.c.l.b16 %v779
        %v816 = vunpack.c.l.b16 %v780
        %v817 = vunpack.c.l.b16 %v781
        %v818 = vunpack.c.l.b16 %v782
        %v819 = vunpack.c.l.b16 %v783
        %v820 = vunpack.c.l.b16 %v784
        %v821 = vunpack.c.l.b16 %v785
        %v822 = vunpack.c.l.b16 %v786
        %v823 = vunpack.c.l.b16 %v787
        %v824 = vpack.c.b16 %v809, %v808
        %v825 = vpack.c.b16 %v811, %v810
        %v826 = vpack.c.b16 %v813, %v812
        %v827 = vpack.c.b16 %v815, %v814
        %v828 = vpack.c.b16 %v817, %v816
        %v829 = vpack.c.b16 %v819, %v818
        %v830 = vpack.c.b16 %v821, %v820
        %v831 = vpack.c.b16 %v823, %v822
        %840 = vmatpush.bf16.msra.mxu0 %v831
        %841 = vmatpush.bf16.msra.mxu0 %v830
        %842 = vmatpush.bf16.msra.mxu0 %v829
        %843 = vmatpush.bf16.msra.mxu0 %v828
        %844 = vmatpush.bf16.msra.mxu0 %v827
        %845 = vmatpush.bf16.msra.mxu0 %v826
        %846 = vmatpush.bf16.msra.mxu0 %v825
        %847 = vmatpush.bf16.msra.mxu0 %v824
        %848 = vmatmul.bf16.gmra.mxu0 %v771
        %v849 = vpop.f32.mrf.mxu0
        %v850 = vadd.f32 %v790, %v849
        %v851 = vpop.f32.mrf.mxu0
        %852 = vdwg.mxu0
        %v853 = vadd.f32 %v732, %v850
        %v854 = vsel %vm469, %v853, 0.0
        %855 = vadd.xlane.f32.xlu0 %v854
        %v856 = vpop.xlane.xlu0 %855
        %v857 = vmul.f32 %v856, %v703
        %v858 = vsub.f32 %v853, %v857
        %v859 = vmul.f32 %v858, %v858
        %v860 = vsel %vm469, %v859, 0.0
        %861 = vadd.xlane.f32.xlu0 %v860
        %v862 = vpop.xlane.xlu0 %861
        %v863 = vmul.f32 %v862, %v703
        %v864 = vadd.f32 %v863, 1e-05
        %v865 = vrsqrt.pop %v864
        %v866 = vmul.f32 %v865, %v864
        %v867 = vmul.f32 %v866, %v865
        %v868 = vmul.f32 0.5, %v867
        %v869 = vsub.f32 1.5, %v868
        %v870 = vmul.f32 %v865, %v869
        %vm871 = vweird.f32 %v864
        %vm872 = vweird.f32 %v865
        %vm873 = vmor %vm871, %vm872
        %v874 = vsel %vm873, %v865, %v870
        %v875 = vmul.f32 %v858, %v874
        %v876 = vld [vmem:[%s11] sm:$0x1]
        %v878 = vperm.slane %v876, 0
        %v880 = vmul.f32 %v875, %v878
        %v881 = vld [vmem:[%s12] sm:$0x1]
        %v883 = vperm.slane %v881, 0
        %v885 = vadd.f32 %v880, %v883
        %v886 = vpack.c.bf16 %v885, %v885
        %vm887 = vcmask 257024
        %888 = vst.msk [vmem:[%s431] sm:$0xf] %vm887, %v886
        %s889 = sand.u32 %s313, 1
        %s890 = scalar_lea.sflag [#allocation3], %s889
        %s891 = sand.u32 %s313, 1
        %s892 = smul.addr %s891, 4
        %s893 = scalar_lea.vmem [#allocation2], %s892
        // Predicated region
        $region73: #{tpu_custom_call.1} parent=71 // pred_check
          %p894 = pneg %p323
        $region74: #{tpu_custom_call.1} parent=71 // pred_check_branch
          %896 = sbr.rel (%p894) target = $region76
        $region75: #{tpu_custom_call.1} parent=71 // pred_region
          %898 = vsyncadd %s890, 0
          %s899 = smul.addr %s27, 4
          %s900 = scalar_lea.hbm %s13, %s899
          %s902 = sshll.u32 %s893, 4
          %s903 = int_to_ptr.vmem [resolvable:$true] %s902
          %s904 = sshll.u32 %s900, 4
          %s905 = int_to_ptr.hbm [resolvable:$true] %s904
          %907 = dma.vmem_to_hbm [thread:$0]  %s903, 64, %s905, %s890
        $region76: #{tpu_custom_call.1} parent=71 // pred_fallthru
          _
      $region72: #{tpu_custom_call.1} parent=5 // pred_fallthru
        _
      %p908 = scmp.le.s32.totalorder 2, %s22
      // Predicated region
      $region77: #{tpu_custom_call.1} parent=5 // pred_check
        %p909 = pneg %p908
      $region78: #{tpu_custom_call.1} parent=5 // pred_check_branch
        %911 = sbr.rel (%p909) target = $region80
      $region79: #{tpu_custom_call.1} parent=5 // pred_region
        %s912 = ssub.s32 %s22, 2
        // Predicated region
        $region81: #{tpu_custom_call.1} parent=79 // pred_check
          %p913 = pneg %p329
        $region82: #{tpu_custom_call.1} parent=79 // pred_check_branch
          %915 = sbr.rel (%p913) target = $region84
        $region83: #{tpu_custom_call.1} parent=79 // pred_region
          %s916 = sand.u32 %s314, 1
          %s917 = scalar_lea.sflag [#allocation3], %s916
          %s918 = sand.u32 %s314, 1
          %s919 = smul.addr %s918, 4
          %s920 = scalar_lea.vmem [#allocation2], %s919
          %922 = dma.done %s917, 64
        $region84: #{tpu_custom_call.1} parent=79 // pred_fallthru
          _
      $region80: #{tpu_custom_call.1} parent=5 // pred_fallthru
        _
    $region6: #{tpu_custom_call.1} parent=1 // loop_footer
      %s26 = sadd.s32 1, %s22
    $region7: #{tpu_custom_call.1} parent=1 // loop_footer_branch
      %21 = sbr.rel target = $region3
    $region8: #{tpu_custom_call.1} parent=1 // loop_exit
      _
    %923 = vsyncpa [#allocation3], 1
    %s924 = scalar_lea.sflag [#allocation3], 1
    %925 = vsyncpa %s924, 1

// kernel: tpu_custom_call.1
$region0: #{tpu_custom_call.1}
  #allocation0 [shape = 'u32[]', space=smem, size = 0x4, offset = 0x4, fixed_abs, tag = 'smem constant byte address 0x4 - core index']
  #allocation1 [shape = 'u32[72,128]{1,0:T(1,128)}', space=vmem, size = 0x9000, scoped, tag = 'internal scratch']
  %s0 = inlined_call_operand.vmem [shape: f32[2,8,32], index: 0, kind: input, shape index: {}]
  %s1 = inlined_call_operand.vmem [shape: bf16[32,192], index: 1, kind: input, shape index: {}]
  %s2 = inlined_call_operand.vmem [shape: f32[1,192], index: 2, kind: input, shape index: {}]
  %s3 = inlined_call_operand.vmem [shape: bf16[64,32], index: 3, kind: input, shape index: {}]
  %s4 = inlined_call_operand.vmem [shape: f32[1,32], index: 4, kind: input, shape index: {}]
  %s5 = inlined_call_operand.vmem [shape: f32[1,32], index: 5, kind: input, shape index: {}]
  %s6 = inlined_call_operand.vmem [shape: f32[1,32], index: 6, kind: input, shape index: {}]
  %s7 = inlined_call_operand.vmem [shape: bf16[32,128], index: 7, kind: input, shape index: {}]
  %s8 = inlined_call_operand.vmem [shape: f32[1,128], index: 8, kind: input, shape index: {}]
  %s9 = inlined_call_operand.vmem [shape: bf16[128,32], index: 9, kind: input, shape index: {}]
  %s10 = inlined_call_operand.vmem [shape: f32[1,32], index: 10, kind: input, shape index: {}]
  %s11 = inlined_call_operand.vmem [shape: f32[1,32], index: 11, kind: input, shape index: {}]
  %s12 = inlined_call_operand.vmem [shape: f32[1,32], index: 12, kind: input, shape index: {}]
  %s13 = inlined_call_operand.hbm [shape: bf16[2,8,32], index: 13, kind: output, shape index: {}]
  %s14 = sld [smem:[#allocation0]]
  $region85: #{tpu_custom_call.1} parent=0
    _
  %s16 = ssub.s32 1, %s14
  %s17 = scalar_select 0, %s16, %s14
  $region1: #{tpu_custom_call.1} parent=0
    #allocation2 [shape = 'u8[4096]{0}', space=vmem, size = 0x1000, scoped, tag = 'output window, operand 0']
    #allocation3 [shape = 's32[2]{0}', space=sflag, size = 0x8, scoped, tag = 'scoped memory for tpu_custom_call.1']
    %18 = vsyncpa [#allocation3], 0
    %s19 = scalar_lea.sflag [#allocation3], 1
    %20 = vsyncpa %s19, 0
    loop: start=0, step=1, limit=4
    $region2: #{tpu_custom_call.1} parent=1 // loop_pre_header
      _
    $region3: #{tpu_custom_call.1} parent=1 // loop_header
      %s22 = sphi 0, %s26
      %p23 = scmp.ge.s32.totalorder %s22, 4
      %s32 = sphi 0, %s34
      %s35 = sphi 0, %s32
      %s36 = sphi 0, %s35
      %s52 = sphi 0, %s36
      %s56 = sphi 0, %s56
      %s58 = sphi 0, %s56
      %s59 = sphi 0, %s58
      %s73 = sphi 0, %s59
      %s77 = sphi 0, %s77
      %s79 = sphi 0, %s77
      %s80 = sphi 0, %s79
      %s94 = sphi 0, %s80
      %s98 = sphi 0, %s98
      %s100 = sphi 0, %s98
      %s101 = sphi 0, %s100
      %s115 = sphi 0, %s101
      %s119 = sphi 0, %s119
      %s121 = sphi 0, %s119
      %s122 = sphi 0, %s121
      %s136 = sphi 0, %s122
      %s140 = sphi 0, %s140
      %s142 = sphi 0, %s140
      %s143 = sphi 0, %s142
      %s157 = sphi 0, %s143
      %s161 = sphi 0, %s161
      %s163 = sphi 0, %s161
      %s164 = sphi 0, %s163
      %s178 = sphi 0, %s164
      %s182 = sphi 0, %s182
      %s184 = sphi 0, %s182
      %s185 = sphi 0, %s184
      %s199 = sphi 0, %s185
      %s203 = sphi 0, %s203
      %s205 = sphi 0, %s203
      %s206 = sphi 0, %s205
      %s220 = sphi 0, %s206
      %s224 = sphi 0, %s224
      %s226 = sphi 0, %s224
      %s227 = sphi 0, %s226
      %s241 = sphi 0, %s227
      %s245 = sphi 0, %s245
      %s247 = sphi 0, %s245
      %s248 = sphi 0, %s247
      %s262 = sphi 0, %s248
      %s266 = sphi 0, %s266
      %s268 = sphi 0, %s266
      %s269 = sphi 0, %s268
      %s283 = sphi 0, %s269
      %s287 = sphi 0, %s287
      %s289 = sphi 0, %s287
      %s290 = sphi 0, %s289
      %s304 = sphi 0, %s290
      %s310 = sphi 0, %s312
      %s313 = sphi 0, %s310
      %s314 = sphi 0, %s313
      %s330 = sphi 0, %s314
    $region4: #{tpu_custom_call.1} parent=1 // loop_header_branch
      %25 = sbr.rel (%p23) target = $region8
    $region5: #{tpu_custom_call.1} parent=1 // loop_body
      %s27 = ssub.s32 %s22, 1
      %s28 = ssub.s32 %s22, 2
      %s29 = sadd.s32 %s22, 1
      %s30 = ssub.s32 %s22, %s29
      %p31 = scmp.eq.s32.totalorder %s30, 0
      %s33 = sadd.s32 %s32, 1
      %s34 = scalar_select %p31, %s32, %s33
      %p37 = pneg %p31
      %p38 = scmp.eq.s32.totalorder %s22, 1
      %p39 = por %p37, %p38
      %p40 = scmp.ne.s32.totalorder %s32, %s35
      %p41 = scmp.eq.s32.totalorder %s22, 0
      %p42 = por %p40, %p41
      %p43 = scmp.ne.s32.totalorder %s32, %s35
      %p44 = scmp.eq.s32.totalorder %s27, 1
      %p45 = por %p43, %p44
      %p46 = scmp.ne.s32.totalorder %s35, %s36
      %p47 = scmp.eq.s32.totalorder %s27, 0
      %p48 = por %p46, %p47
      %p49 = scmp.ne.s32.totalorder %s35, %s36
      %p50 = scmp.eq.s32.totalorder %s28, 1
      %p51 = por %p49, %p50
      %p53 = scmp.ne.s32.totalorder %s36, %s52
      %p54 = scmp.eq.s32.totalorder %s28, 0
      %p55 = por %p53, %p54
      %s57 = sadd.s32 %s56, 1
      %p60 = scmp.eq.s32.totalorder %s22, 1
      %p61 = scmp.ne.s32.totalorder %s56, %s58
      %p62 = scmp.eq.s32.totalorder %s22, 0
      %p63 = por %p61, %p62
      %p64 = scmp.ne.s32.totalorder %s56, %s58
      %p65 = scmp.eq.s32.totalorder %s27, 1
      %p66 = por %p64, %p65
      %p67 = scmp.ne.s32.totalorder %s58, %s59
      %p68 = scmp.eq.s32.totalorder %s27, 0
      %p69 = por %p67, %p68
      %p70 = scmp.ne.s32.totalorder %s58, %s59
      %p71 = scmp.eq.s32.totalorder %s28, 1
      %p72 = por %p70, %p71
      %p74 = scmp.ne.s32.totalorder %s59, %s73
      %p75 = scmp.eq.s32.totalorder %s28, 0
      %p76 = por %p74, %p75
      %s78 = sadd.s32 %s77, 1
      %p81 = scmp.eq.s32.totalorder %s22, 1
      %p82 = scmp.ne.s32.totalorder %s77, %s79
      %p83 = scmp.eq.s32.totalorder %s22, 0
      %p84 = por %p82, %p83
      %p85 = scmp.ne.s32.totalorder %s77, %s79
      %p86 = scmp.eq.s32.totalorder %s27, 1
      %p87 = por %p85, %p86
      %p88 = scmp.ne.s32.totalorder %s79, %s80
      %p89 = scmp.eq.s32.totalorder %s27, 0
      %p90 = por %p88, %p89
      %p91 = scmp.ne.s32.totalorder %s79, %s80
      %p92 = scmp.eq.s32.totalorder %s28, 1
      %p93 = por %p91, %p92
      %p95 = scmp.ne.s32.totalorder %s80, %s94
      %p96 = scmp.eq.s32.totalorder %s28, 0
      %p97 = por %p95, %p96
      %s99 = sadd.s32 %s98, 1
      %p102 = scmp.eq.s32.totalorder %s22, 1
      %p103 = scmp.ne.s32.totalorder %s98, %s100
      %p104 = scmp.eq.s32.totalorder %s22, 0
      %p105 = por %p103, %p104
      %p106 = scmp.ne.s32.totalorder %s98, %s100
      %p107 = scmp.eq.s32.totalorder %s27, 1
      %p108 = por %p106, %p107
      %p109 = scmp.ne.s32.totalorder %s100, %s101
      %p110 = scmp.eq.s32.totalorder %s27, 0
      %p111 = por %p109, %p110
      %p112 = scmp.ne.s32.totalorder %s100, %s101
      %p113 = scmp.eq.s32.totalorder %s28, 1
      %p114 = por %p112, %p113
      %p116 = scmp.ne.s32.totalorder %s101, %s115
      %p117 = scmp.eq.s32.totalorder %s28, 0
      %p118 = por %p116, %p117
      %s120 = sadd.s32 %s119, 1
      %p123 = scmp.eq.s32.totalorder %s22, 1
      %p124 = scmp.ne.s32.totalorder %s119, %s121
      %p125 = scmp.eq.s32.totalorder %s22, 0
      %p126 = por %p124, %p125
      %p127 = scmp.ne.s32.totalorder %s119, %s121
      %p128 = scmp.eq.s32.totalorder %s27, 1
      %p129 = por %p127, %p128
      %p130 = scmp.ne.s32.totalorder %s121, %s122
      %p131 = scmp.eq.s32.totalorder %s27, 0
      %p132 = por %p130, %p131
      %p133 = scmp.ne.s32.totalorder %s121, %s122
      %p134 = scmp.eq.s32.totalorder %s28, 1
      %p135 = por %p133, %p134
      %p137 = scmp.ne.s32.totalorder %s122, %s136
      %p138 = scmp.eq.s32.totalorder %s28, 0
      %p139 = por %p137, %p138
      %s141 = sadd.s32 %s140, 1
      %p144 = scmp.eq.s32.totalorder %s22, 1
      %p145 = scmp.ne.s32.totalorder %s140, %s142
      %p146 = scmp.eq.s32.totalorder %s22, 0
      %p147 = por %p145, %p146
      %p148 = scmp.ne.s32.totalorder %s140, %s142
      %p149 = scmp.eq.s32.totalorder %s27, 1
      %p150 = por %p148, %p149
      %p151 = scmp.ne.s32.totalorder %s142, %s143
      %p152 = scmp.eq.s32.totalorder %s27, 0
      %p153 = por %p151, %p152
      %p154 = scmp.ne.s32.totalorder %s142, %s143
      %p155 = scmp.eq.s32.totalorder %s28, 1
      %p156 = por %p154, %p155
      %p158 = scmp.ne.s32.totalorder %s143, %s157
      %p159 = scmp.eq.s32.totalorder %s28, 0
      %p160 = por %p158, %p159
      %s162 = sadd.s32 %s161, 1
      %p165 = scmp.eq.s32.totalorder %s22, 1
      %p166 = scmp.ne.s32.totalorder %s161, %s163
      %p167 = scmp.eq.s32.totalorder %s22, 0
      %p168 = por %p166, %p167
      %p169 = scmp.ne.s32.totalorder %s161, %s163
      %p170 = scmp.eq.s32.totalorder %s27, 1
      %p171 = por %p169, %p170
      %p172 = scmp.ne.s32.totalorder %s163, %s164
      %p173 = scmp.eq.s32.totalorder %s27, 0
      %p174 = por %p172, %p173
      %p175 = scmp.ne.s32.totalorder %s163, %s164
      %p176 = scmp.eq.s32.totalorder %s28, 1
      %p177 = por %p175, %p176
      %p179 = scmp.ne.s32.totalorder %s164, %s178
      %p180 = scmp.eq.s32.totalorder %s28, 0
      %p181 = por %p179, %p180
      %s183 = sadd.s32 %s182, 1
      %p186 = scmp.eq.s32.totalorder %s22, 1
      %p187 = scmp.ne.s32.totalorder %s182, %s184
      %p188 = scmp.eq.s32.totalorder %s22, 0
      %p189 = por %p187, %p188
      %p190 = scmp.ne.s32.totalorder %s182, %s184
      %p191 = scmp.eq.s32.totalorder %s27, 1
      %p192 = por %p190, %p191
      %p193 = scmp.ne.s32.totalorder %s184, %s185
      %p194 = scmp.eq.s32.totalorder %s27, 0
      %p195 = por %p193, %p194
      %p196 = scmp.ne.s32.totalorder %s184, %s185
      %p197 = scmp.eq.s32.totalorder %s28, 1
      %p198 = por %p196, %p197
      %p200 = scmp.ne.s32.totalorder %s185, %s199
      %p201 = scmp.eq.s32.totalorder %s28, 0
      %p202 = por %p200, %p201
      %s204 = sadd.s32 %s203, 1
      %p207 = scmp.eq.s32.totalorder %s22, 1
      %p208 = scmp.ne.s32.totalorder %s203, %s205
      %p209 = scmp.eq.s32.totalorder %s22, 0
      %p210 = por %p208, %p209
      %p211 = scmp.ne.s32.totalorder %s203, %s205
      %p212 = scmp.eq.s32.totalorder %s27, 1
      %p213 = por %p211, %p212
      %p214 = scmp.ne.s32.totalorder %s205, %s206
      %p215 = scmp.eq.s32.totalorder %s27, 0
      %p216 = por %p214, %p215
      %p217 = scmp.ne.s32.totalorder %s205, %s206
      %p218 = scmp.eq.s32.totalorder %s28, 1
      %p219 = por %p217, %p218
      %p221 = scmp.ne.s32.totalorder %s206, %s220
      %p222 = scmp.eq.s32.totalorder %s28, 0
      %p223 = por %p221, %p222
      %s225 = sadd.s32 %s224, 1
      %p228 = scmp.eq.s32.totalorder %s22, 1
      %p229 = scmp.ne.s32.totalorder %s224, %s226
      %p230 = scmp.eq.s32.totalorder %s22, 0
      %p231 = por %p229, %p230
      %p232 = scmp.ne.s32.totalorder %s224, %s226
      %p233 = scmp.eq.s32.totalorder %s27, 1
      %p234 = por %p232, %p233
      %p235 = scmp.ne.s32.totalorder %s226, %s227
      %p236 = scmp.eq.s32.totalorder %s27, 0
      %p237 = por %p235, %p236
      %p238 = scmp.ne.s32.totalorder %s226, %s227
      %p239 = scmp.eq.s32.totalorder %s28, 1
      %p240 = por %p238, %p239
      %p242 = scmp.ne.s32.totalorder %s227, %s241
      %p243 = scmp.eq.s32.totalorder %s28, 0
      %p244 = por %p242, %p243
      %s246 = sadd.s32 %s245, 1
      %p249 = scmp.eq.s32.totalorder %s22, 1
      %p250 = scmp.ne.s32.totalorder %s245, %s247
      %p251 = scmp.eq.s32.totalorder %s22, 0
      %p252 = por %p250, %p251
      %p253 = scmp.ne.s32.totalorder %s245, %s247
      %p254 = scmp.eq.s32.totalorder %s27, 1
      %p255 = por %p253, %p254
      %p256 = scmp.ne.s32.totalorder %s247, %s248
      %p257 = scmp.eq.s32.totalorder %s27, 0
      %p258 = por %p256, %p257
      %p259 = scmp.ne.s32.totalorder %s247, %s248
      %p260 = scmp.eq.s32.totalorder %s28, 1
      %p261 = por %p259, %p260
      %p263 = scmp.ne.s32.totalorder %s248, %s262
      %p264 = scmp.eq.s32.totalorder %s28, 0
      %p265 = por %p263, %p264
      %s267 = sadd.s32 %s266, 1
      %p270 = scmp.eq.s32.totalorder %s22, 1
      %p271 = scmp.ne.s32.totalorder %s266, %s268
      %p272 = scmp.eq.s32.totalorder %s22, 0
      %p273 = por %p271, %p272
      %p274 = scmp.ne.s32.totalorder %s266, %s268
      %p275 = scmp.eq.s32.totalorder %s27, 1
      %p276 = por %p274, %p275
      %p277 = scmp.ne.s32.totalorder %s268, %s269
      %p278 = scmp.eq.s32.totalorder %s27, 0
      %p279 = por %p277, %p278
      %p280 = scmp.ne.s32.totalorder %s268, %s269
      %p281 = scmp.eq.s32.totalorder %s28, 1
      %p282 = por %p280, %p281
      %p284 = scmp.ne.s32.totalorder %s269, %s283
      %p285 = scmp.eq.s32.totalorder %s28, 0
      %p286 = por %p284, %p285
      %s288 = sadd.s32 %s287, 1
      %p291 = scmp.eq.s32.totalorder %s22, 1
      %p292 = scmp.ne.s32.totalorder %s287, %s289
      %p293 = scmp.eq.s32.totalorder %s22, 0
      %p294 = por %p292, %p293
      %p295 = scmp.ne.s32.totalorder %s287, %s289
      %p296 = scmp.eq.s32.totalorder %s27, 1
      %p297 = por %p295, %p296
      %p298 = scmp.ne.s32.totalorder %s289, %s290
      %p299 = scmp.eq.s32.totalorder %s27, 0
      %p300 = por %p298, %p299
      %p301 = scmp.ne.s32.totalorder %s289, %s290
      %p302 = scmp.eq.s32.totalorder %s28, 1
      %p303 = por %p301, %p302
      %p305 = scmp.ne.s32.totalorder %s290, %s304
      %p306 = scmp.eq.s32.totalorder %s28, 0
      %p307 = por %p305, %p306
      %s308 = ssub.s32 %s22, %s29
      %p309 = scmp.eq.s32.totalorder %s308, 0
      %s311 = sadd.s32 %s310, 1
      %s312 = scalar_select %p309, %s310, %s311
      %p315 = pneg %p309
      %p316 = scmp.eq.s32.totalorder %s22, 1
      %p317 = por %p315, %p316
      %p318 = scmp.ne.s32.totalorder %s310, %s313
      %p319 = scmp.eq.s32.totalorder %s22, 0
      %p320 = por %p318, %p319
      %p321 = scmp.ne.s32.totalorder %s310, %s313
      %p322 = scmp.eq.s32.totalorder %s27, 1
      %p323 = por %p321, %p322
      %p324 = scmp.ne.s32.totalorder %s313, %s314
      %p325 = scmp.eq.s32.totalorder %s27, 0
      %p326 = por %p324, %p325
      %p327 = scmp.ne.s32.totalorder %s313, %s314
      %p328 = scmp.eq.s32.totalorder %s28, 1
      %p329 = por %p327, %p328
      %p331 = scmp.ne.s32.totalorder %s314, %s330
      %p332 = scmp.eq.s32.totalorder %s28, 0
      %p333 = por %p331, %p332
      %p334 = scmp.le.s32.totalorder 1, %s22
      %p335 = scmp.lt.s32.totalorder %s22, 3
      %p336 = pnand %p334, %p335
      %p337 = pneg %p336
      // Predicated region
      $region9: #{tpu_custom_call.1} parent=5 // pred_check
        _
      $region10: #{tpu_custom_call.1} parent=5 // pred_check_branch
        %339 = sbr.rel (%p336) target = $region12
      $region11: #{tpu_custom_call.1} parent=5 // pred_region
        %s340 = ssub.s32 %s22, 1
        // Predicated region
        $region13: #{tpu_custom_call.1} parent=11 // pred_check
          %p341 = pneg %p69
        $region14: #{tpu_custom_call.1} parent=11 // pred_check_branch
          %343 = sbr.rel (%p341) target = $region16
        $region15: #{tpu_custom_call.1} parent=11 // pred_region
          _
        $region16: #{tpu_custom_call.1} parent=11 // pred_fallthru
          _
        // Predicated region
        $region17: #{tpu_custom_call.1} parent=11 // pred_check
          %p344 = pneg %p90
        $region18: #{tpu_custom_call.1} parent=11 // pred_check_branch
          %346 = sbr.rel (%p344) target = $region20
        $region19: #{tpu_custom_call.1} parent=11 // pred_region
          _
        $region20: #{tpu_custom_call.1} parent=11 // pred_fallthru
          _
        // Predicated region
        $region21: #{tpu_custom_call.1} parent=11 // pred_check
          %p347 = pneg %p111
        $region22: #{tpu_custom_call.1} parent=11 // pred_check_branch
          %349 = sbr.rel (%p347) target = $region24
        $region23: #{tpu_custom_call.1} parent=11 // pred_region
          _
        $region24: #{tpu_custom_call.1} parent=11 // pred_fallthru
          _
        // Predicated region
        $region25: #{tpu_custom_call.1} parent=11 // pred_check
          %p350 = pneg %p132
        $region26: #{tpu_custom_call.1} parent=11 // pred_check_branch
          %352 = sbr.rel (%p350) target = $region28
        $region27: #{tpu_custom_call.1} parent=11 // pred_region
          _
        $region28: #{tpu_custom_call.1} parent=11 // pred_fallthru
          _
        // Predicated region
        $region29: #{tpu_custom_call.1} parent=11 // pred_check
          %p353 = pneg %p153
        $region30: #{tpu_custom_call.1} parent=11 // pred_check_branch
          %355 = sbr.rel (%p353) target = $region32
        $region31: #{tpu_custom_call.1} parent=11 // pred_region
          _
        $region32: #{tpu_custom_call.1} parent=11 // pred_fallthru
          _
        // Predicated region
        $region33: #{tpu_custom_call.1} parent=11 // pred_check
          %p356 = pneg %p174
        $region34: #{tpu_custom_call.1} parent=11 // pred_check_branch
          %358 = sbr.rel (%p356) target = $region36
        $region35: #{tpu_custom_call.1} parent=11 // pred_region
          _
        $region36: #{tpu_custom_call.1} parent=11 // pred_fallthru
          _
        // Predicated region
        $region37: #{tpu_custom_call.1} parent=11 // pred_check
          %p359 = pneg %p195
        $region38: #{tpu_custom_call.1} parent=11 // pred_check_branch
          %361 = sbr.rel (%p359) target = $region40
        $region39: #{tpu_custom_call.1} parent=11 // pred_region
          _
        $region40: #{tpu_custom_call.1} parent=11 // pred_fallthru
          _
        // Predicated region
        $region41: #{tpu_custom_call.1} parent=11 // pred_check
          %p362 = pneg %p216
        $region42: #{tpu_custom_call.1} parent=11 // pred_check_branch
          %364 = sbr.rel (%p362) target = $region44
        $region43: #{tpu_custom_call.1} parent=11 // pred_region
          _
        $region44: #{tpu_custom_call.1} parent=11 // pred_fallthru
          _
        // Predicated region
        $region45: #{tpu_custom_call.1} parent=11 // pred_check
          %p365 = pneg %p237
        $region46: #{tpu_custom_call.1} parent=11 // pred_check_branch
          %367 = sbr.rel (%p365) target = $region48
        $region47: #{tpu_custom_call.1} parent=11 // pred_region
          _
        $region48: #{tpu_custom_call.1} parent=11 // pred_fallthru
          _
        // Predicated region
        $region49: #{tpu_custom_call.1} parent=11 // pred_check
          %p368 = pneg %p258
        $region50: #{tpu_custom_call.1} parent=11 // pred_check_branch
          %370 = sbr.rel (%p368) target = $region52
        $region51: #{tpu_custom_call.1} parent=11 // pred_region
          _
        $region52: #{tpu_custom_call.1} parent=11 // pred_fallthru
          _
        // Predicated region
        $region53: #{tpu_custom_call.1} parent=11 // pred_check
          %p371 = pneg %p279
        $region54: #{tpu_custom_call.1} parent=11 // pred_check_branch
          %373 = sbr.rel (%p371) target = $region56
        $region55: #{tpu_custom_call.1} parent=11 // pred_region
          _
        $region56: #{tpu_custom_call.1} parent=11 // pred_fallthru
          _
        // Predicated region
        $region57: #{tpu_custom_call.1} parent=11 // pred_check
          %p374 = pneg %p300
        $region58: #{tpu_custom_call.1} parent=11 // pred_check_branch
          %376 = sbr.rel (%p374) target = $region60
        $region59: #{tpu_custom_call.1} parent=11 // pred_region
          _
        $region60: #{tpu_custom_call.1} parent=11 // pred_fallthru
          _
      $region12: #{tpu_custom_call.1} parent=5 // pred_fallthru
        _
      %p377 = scmp.lt.s32.totalorder %s22, 2
      // Predicated region
      $region61: #{tpu_custom_call.1} parent=5 // pred_check
        %p378 = pneg %p377
      $region62: #{tpu_custom_call.1} parent=5 // pred_check_branch
        %380 = sbr.rel (%p378) target = $region64
      $region63: #{tpu_custom_call.1} parent=5 // pred_region
        // Predicated region
        $region65: #{tpu_custom_call.1} parent=63 // pred_check
          %p381 = pneg %p42
        $region66: #{tpu_custom_call.1} parent=63 // pred_check_branch
          %383 = sbr.rel (%p381) target = $region68
        $region67: #{tpu_custom_call.1} parent=63 // pred_region
          %p384 = scmp.lt.s32.totalorder %s22, 1
          %s385 = scalar_select %p384, %s22, 1
          %s386 = smul.addr %s385, 8
          %s387 = scalar_lea.vmem %s0, %s386
        $region68: #{tpu_custom_call.1} parent=63 // pred_fallthru
          _
      $region64: #{tpu_custom_call.1} parent=5 // pred_fallthru
        _
      %p388 = scmp.le.s32.totalorder 1, %s22
      %p389 = scmp.lt.s32.totalorder %s22, 3
      %p390 = pnand %p388, %p389
      %p391 = pneg %p390
      // Predicated region
      $region69: #{tpu_custom_call.1} parent=5 // pred_check
        _
      $region70: #{tpu_custom_call.1} parent=5 // pred_check_branch
        %393 = sbr.rel (%p390) target = $region72
      $region71: #{tpu_custom_call.1} parent=5 // pred_region
        %s394 = ssub.s32 %s22, 1
        %p395 = scmp.lt.s32.totalorder %s27, 1
        %s396 = scalar_select %p395, %s27, 1
        %s397 = smul.addr %s396, 8
        %s398 = scalar_lea.vmem %s0, %s397
        %p399 = pneg %p48
        %p400 = pneg %p45
        %p401 = pneg %p69
        %p402 = pneg %p66
        %p403 = pneg %p90
        %p404 = pneg %p87
        %p405 = pneg %p111
        %p406 = pneg %p108
        %p407 = pneg %p132
        %p408 = pneg %p129
        %p409 = pneg %p153
        %p410 = pneg %p150
        %p411 = pneg %p174
        %p412 = pneg %p171
        %p413 = pneg %p195
        %p414 = pneg %p192
        %p415 = pneg %p216
        %p416 = pneg %p213
        %p417 = pneg %p237
        %p418 = pneg %p234
        %p419 = pneg %p258
        %p420 = pneg %p255
        %p421 = pneg %p279
        %p422 = pneg %p276
        %p423 = pneg %p300
        %p424 = pneg %p297
        %p425 = pneg %p326
        %p426 = pneg %p323
        %s427 = sand.u32 %s313, 1
        %s428 = scalar_lea.sflag [#allocation3], %s427
        %s429 = sand.u32 %s313, 1
        %s430 = smul.addr %s429, 4
        %s431 = scalar_lea.vmem [#allocation2], %s430
        %p432 = scmp.lt.s32.totalorder %s27, 1
        %s433 = scalar_select %p432, %s27, 1
        %s434 = smul.addr %s433, 8
        %s435 = scalar_lea.vmem %s0, %s434
        %v437 = vld [vmem:[%s435] sm:$0xff]
        %v438 = vpack.c.bf16 %v437, %v437
        %v439 = vld [vmem:[%s1] sm:$0xff]
        %v440 = vld [vmem:[%s1 + $0x8] sm:$0xff]
        %v441 = vld [vmem:[%s1 + $0x10] sm:$0xff]
        %v442 = vld [vmem:[%s1 + $0x18] sm:$0xff]
        %v443 = vld [vmem:[%s2] sm:$0x3]
        %v445 = vperm.slane %v443, 0
        %v446 = vperm.slane %v443, 1
        %v453 = vunpack.c.l.b16 %v439
        %v454 = vunpack.c.h.b16 %v439
        %v455 = vunpack.c.l.b16 %v440
        %v456 = vunpack.c.h.b16 %v440
        %v457 = vunpack.c.l.b16 %v441
        %v458 = vunpack.c.h.b16 %v441
        %v459 = vunpack.c.l.b16 %v442
        %v460 = vunpack.c.h.b16 %v442
        %v461 = vpack.c.b16 %v455, %v453
        %v462 = vpack.c.b16 %v456, %v454
        %v463 = vpack.c.b16 %v459, %v457
        %v464 = vpack.c.b16 %v460, %v458
        %vm469 = vcmask 261120
        %v471 = vsel %vm469, %v438, 0
        %473 = vmatpush.bf16.msra.mxu0 0
        %474 = vmatpush.bf16.msra.mxu0 0
        %475 = vmatpush.bf16.msra.mxu0 0
        %476 = vmatpush.bf16.msra.mxu0 0
        %477 = vmatpush.bf16.msra.mxu0 0
        %478 = vmatpush.bf16.msra.mxu0 0
        %479 = vmatpush.bf16.msra.mxu0 %v463
        %480 = vmatpush.bf16.msra.mxu0 %v461
        %481 = vmatmul.bf16.gmra.mxu0 %v471
        %v482 = vpop.f32.mrf.mxu0
        %v483 = vadd.f32 %v445, %v482
        %v484 = vpop.f32.mrf.mxu0
        %485 = vdwg.mxu0
        %486 = vmatpush.bf16.msra.mxu0 0
        %487 = vmatpush.bf16.msra.mxu0 0
        %488 = vmatpush.bf16.msra.mxu0 0
        %489 = vmatpush.bf16.msra.mxu0 0
        %490 = vmatpush.bf16.msra.mxu0 0
        %491 = vmatpush.bf16.msra.mxu0 0
        %492 = vmatpush.bf16.msra.mxu0 %v464
        %493 = vmatpush.bf16.msra.mxu0 %v462
        %494 = vmatmul.bf16.gmra.mxu0 %v471
        %v495 = vpop.f32.mrf.mxu0
        %v496 = vadd.f32 %v446, %v495
        %v497 = vpop.f32.mrf.mxu0
        %498 = vdwg.mxu0
        %v499 = vpack.c.bf16 %v496, %v483
        %v500 = vlaneseq
        %v501 = vshrl.u32 %v500, 7
        %v502 = vlaneseq
        %v503 = vand.u32 %v502, 127
        %vm504 = vcmp.le.s32.totalorder %v503, %v501
        %v506 = vunpack.c.l.b16 %v499
        %v507 = vpack.c.b16 %v506, %v506
        %508 = vrot.lane.b32.xlu0 %v507, 64
        %v509 = vpop.permute.xlu0 %508
        %v511 = vsel %vm469, %v499, 0
        %v514 = vsel %vm469, %v509, 0
        %516 = vmatpush.bf16.xpose.msra.mxu0 0
        %517 = vmatpush.bf16.xpose.msra.mxu0 0
        %518 = vmatpush.bf16.xpose.msra.mxu0 0
        %519 = vmatpush.bf16.xpose.msra.mxu0 0
        %520 = vmatpush.bf16.xpose.msra.mxu0 0
        %521 = vmatpush.bf16.xpose.msra.mxu0 0
        %522 = vmatpush.bf16.xpose.msra.mxu0 0
        %523 = vmatpush.bf16.xpose.msra.mxu0 %v514
        %524 = vmatmul.bf16.gmra.mxu0 %v511
        %v525 = vpop.f32.mrf.mxu0
        %v526 = vadd.f32 0.0, %v525
        %v527 = vpop.f32.mrf.mxu0
        %528 = vdwg.mxu0
        %v529 = vsel %vm504, %v526, -1e+09
        %vm530 = vcmask 64512
        %v531 = vsel %vm530, %v529, -inf
        %532 = vmax.xlane.f32.xlu0 %v531
        %v533 = vpop.xlane.xlu0 %532
        %v534 = vsub.f32 %v529, %v533
        %v535 = vmul.f32 %v534, 1.442695
        %v536 = vpow.pop %v535
        %v537 = vsel %vm530, %v536, 0.0
        %538 = vadd.xlane.f32.xlu0 %v537
        %v539 = vpop.xlane.xlu0 %538
        %v540 = vrcp.pop %v539
        %v541 = vmul.f32 %v536, %v540
        %v542 = vpack.c.bf16 %v541, %v541
        %v543 = vunpack.c.h.b16 %v499
        %v544 = vpack.c.b16 %v543, %v543
        %v546 = vsel %vm530, %v542, 0
        %vm548 = vcmask 1043456
        %v550 = vsel %vm548, %v544, 0
        %552 = vmatpush.bf16.msra.mxu0 0
        %553 = vmatpush.bf16.msra.mxu0 0
        %554 = vmatpush.bf16.msra.mxu0 0
        %555 = vmatpush.bf16.msra.mxu0 0
        %556 = vmatpush.bf16.msra.mxu0 0
        %557 = vmatpush.bf16.msra.mxu0 0
        %558 = vmatpush.bf16.msra.mxu0 0
        %559 = vmatpush.bf16.msra.mxu0 %v550
        %560 = vmatmul.bf16.gmra.mxu0 %v546
        %v561 = vpop.f32.mrf.mxu0
        %v562 = vadd.f32 0.0, %v561
        %v563 = vpop.f32.mrf.mxu0
        %564 = vdwg.mxu0
        %v565 = vpack.c.bf16 %v562, %v562
        %v566 = vld [vmem:[%s3] sm:$0xf]
        %v567 = vld [vmem:[%s3 + $0x4] sm:$0xf]
        %v568 = vld [vmem:[%s3 + $0x8] sm:$0xf]
        %v569 = vld [vmem:[%s3 + $0xc] sm:$0xf]
        %570 = vrot.lane.b32.xlu0 %v507, 96
        %v571 = vpop.permute.xlu0 %570
        %572 = vrot.lane.b32.xlu0 %v507, 32
        %v573 = vpop.permute.xlu0 %572
        %v575 = vsel %vm469, %v571, 0
        %v578 = vsel %vm469, %v573, 0
        %580 = vmatpush.bf16.xpose.msra.mxu0 0
        %581 = vmatpush.bf16.xpose.msra.mxu0 0
        %582 = vmatpush.bf16.xpose.msra.mxu0 0
        %583 = vmatpush.bf16.xpose.msra.mxu0 0
        %584 = vmatpush.bf16.xpose.msra.mxu0 0
        %585 = vmatpush.bf16.xpose.msra.mxu0 0
        %586 = vmatpush.bf16.xpose.msra.mxu0 0
        %587 = vmatpush.bf16.xpose.msra.mxu0 %v578
        %588 = vmatmul.bf16.gmra.mxu0 %v575
        %v589 = vpop.f32.mrf.mxu0
        %v590 = vadd.f32 0.0, %v589
        %v591 = vpop.f32.mrf.mxu0
        %592 = vdwg.mxu0
        %v593 = vsel %vm504, %v590, -1e+09
        %v594 = vsel %vm530, %v593, -inf
        %595 = vmax.xlane.f32.xlu0 %v594
        %v596 = vpop.xlane.xlu0 %595
        %v597 = vsub.f32 %v593, %v596
        %v598 = vmul.f32 %v597, 1.442695
        %v599 = vpow.pop %v598
        %v600 = vsel %vm530, %v599, 0.0
        %601 = vadd.xlane.f32.xlu0 %v600
        %v602 = vpop.xlane.xlu0 %601
        %v603 = vrcp.pop %v602
        %v604 = vmul.f32 %v599, %v603
        %v605 = vpack.c.bf16 %v604, %v604
        %606 = vrot.lane.b32.xlu0 %v544, 96
        %v607 = vpop.permute.xlu0 %606
        %v609 = vsel %vm530, %v605, 0
        %v612 = vsel %vm548, %v607, 0
        %614 = vmatpush.bf16.msra.mxu0 0
        %615 = vmatpush.bf16.msra.mxu0 0
        %616 = vmatpush.bf16.msra.mxu0 0
        %617 = vmatpush.bf16.msra.mxu0 0
        %618 = vmatpush.bf16.msra.mxu0 0
        %619 = vmatpush.bf16.msra.mxu0 0
        %620 = vmatpush.bf16.msra.mxu0 0
        %621 = vmatpush.bf16.msra.mxu0 %v612
        %622 = vmatmul.bf16.gmra.mxu0 %v609
        %v623 = vpop.f32.mrf.mxu0
        %v624 = vadd.f32 0.0, %v623
        %v625 = vpop.f32.mrf.mxu0
        %626 = vdwg.mxu0
        %v627 = vpack.c.bf16 %v624, %v624
        %v628 = vld [vmem:[%s3 + $0x10] sm:$0xf]
        %v629 = vld [vmem:[%s3 + $0x14] sm:$0xf]
        %v630 = vld [vmem:[%s3 + $0x18] sm:$0xf]
        %v631 = vld [vmem:[%s3 + $0x1c] sm:$0xf]
        %v636 = vunpack.c.l.b16 %v628
        %v637 = vunpack.c.l.b16 %v629
        %v638 = vunpack.c.l.b16 %v630
        %v639 = vunpack.c.l.b16 %v631
        %v640 = vpack.c.b16 %v637, %v636
        %v641 = vpack.c.b16 %v639, %v638
        %v645 = vsel %vm469, %v627, 0
        %647 = vmatpush.bf16.msra.mxu0 0
        %648 = vmatpush.bf16.msra.mxu0 0
        %649 = vmatpush.bf16.msra.mxu0 0
        %650 = vmatpush.bf16.msra.mxu0 0
        %651 = vmatpush.bf16.msra.mxu0 0
        %652 = vmatpush.bf16.msra.mxu0 0
        %653 = vmatpush.bf16.msra.mxu0 %v641
        %654 = vmatpush.bf16.msra.mxu0 %v640
        %655 = vmatmul.bf16.gmra.mxu0 %v645
        %v656 = vpop.f32.mrf.mxu0
        %v657 = vadd.f32 0.0, %v656
        %v658 = vpop.f32.mrf.mxu0
        %659 = vdwg.mxu0
        %v664 = vunpack.c.l.b16 %v566
        %v665 = vunpack.c.l.b16 %v567
        %v666 = vunpack.c.l.b16 %v568
        %v667 = vunpack.c.l.b16 %v569
        %v668 = vpack.c.b16 %v665, %v664
        %v669 = vpack.c.b16 %v667, %v666
        %v673 = vsel %vm469, %v565, 0
        %675 = vmatpush.bf16.msra.mxu0 0
        %676 = vmatpush.bf16.msra.mxu0 0
        %677 = vmatpush.bf16.msra.mxu0 0
        %678 = vmatpush.bf16.msra.mxu0 0
        %679 = vmatpush.bf16.msra.mxu0 0
        %680 = vmatpush.bf16.msra.mxu0 0
        %681 = vmatpush.bf16.msra.mxu0 %v669
        %682 = vmatpush.bf16.msra.mxu0 %v668
        %683 = vmatmul.bf16.gmra.mxu0 %v673
        %v684 = vpop.f32.mrf.mxu0
        %v685 = vadd.f32 %v657, %v684
        %v686 = vpop.f32.mrf.mxu0
        %687 = vdwg.mxu0
        %v688 = vld [vmem:[%s4] sm:$0x1]
        %v690 = vperm.slane %v688, 0
        %v692 = vadd.f32 %v685, %v690
        %v693 = vadd.f32 %v437, %v692
        %v694 = vsel %vm469, %v693, 0.0
        %695 = vadd.xlane.f32.xlu0 %v694
        %v696 = vpop.xlane.xlu0 %695
        %v697 = vrcp.pop 32.0
        %v698 = vmul.f32 32.0, %v697
        %v699 = vsub.f32 1.0, %v698
        %v700 = vmul.f32 %v697, %v699
        %v701 = vadd.f32 %v697, %v700
        %vm702 = vweird.f32 %v697
        %v703 = vsel %vm702, %v697, %v701
        %v704 = vmul.f32 %v696, %v703
        %v705 = vsub.f32 %v693, %v704
        %v706 = vmul.f32 %v705, %v705
        %v707 = vsel %vm469, %v706, 0.0
        %708 = vadd.xlane.f32.xlu0 %v707
        %v709 = vpop.xlane.xlu0 %708
        %v710 = vmul.f32 %v709, %v703
        %v711 = vadd.f32 %v710, 1e-05
        %v712 = vrsqrt.pop %v711
        %v713 = vmul.f32 %v712, %v711
        %v714 = vmul.f32 %v713, %v712
        %v715 = vmul.f32 0.5, %v714
        %v716 = vsub.f32 1.5, %v715
        %v717 = vmul.f32 %v712, %v716
        %vm718 = vweird.f32 %v711
        %vm719 = vweird.f32 %v712
        %vm720 = vmor %vm718, %vm719
        %v721 = vsel %vm720, %v712, %v717
        %v722 = vmul.f32 %v705, %v721
        %v723 = vld [vmem:[%s5] sm:$0x1]
        %v725 = vperm.slane %v723, 0
        %v727 = vmul.f32 %v722, %v725
        %v728 = vld [vmem:[%s6] sm:$0x1]
        %v730 = vperm.slane %v728, 0
        %v732 = vadd.f32 %v727, %v730
        %v733 = vpack.c.bf16 %v732, %v732
        %v734 = vld [vmem:[%s7] sm:$0xf]
        %v735 = vld [vmem:[%s7 + $0x4] sm:$0xf]
        %v736 = vld [vmem:[%s7 + $0x8] sm:$0xf]
        %v737 = vld [vmem:[%s7 + $0xc] sm:$0xf]
        %v738 = vld [vmem:[%s8] sm:$0x1]
        %v740 = vperm.slane %v738, 0
        %v746 = vunpack.c.l.b16 %v734
        %v747 = vunpack.c.l.b16 %v735
        %v748 = vunpack.c.l.b16 %v736
        %v749 = vunpack.c.l.b16 %v737
        %v750 = vpack.c.b16 %v747, %v746
        %v751 = vpack.c.b16 %v749, %v748
        %v755 = vsel %vm469, %v733, 0
        %757 = vmatpush.bf16.msra.mxu0 0
        %758 = vmatpush.bf16.msra.mxu0 0
        %759 = vmatpush.bf16.msra.mxu0 0
        %760 = vmatpush.bf16.msra.mxu0 0
        %761 = vmatpush.bf16.msra.mxu0 0
        %762 = vmatpush.bf16.msra.mxu0 0
        %763 = vmatpush.bf16.msra.mxu0 %v751
        %764 = vmatpush.bf16.msra.mxu0 %v750
        %765 = vmatmul.bf16.gmra.mxu0 %v755
        %v766 = vpop.f32.mrf.mxu0
        %v767 = vadd.f32 %v740, %v766
        %v768 = vpop.f32.mrf.mxu0
        %769 = vdwg.mxu0
        %v770 = vmax.f32 %v767, 0.0
        %v771 = vpack.c.bf16 %v770, %v770
        %v772 = vld [vmem:[%s9] sm:$0xf]
        %v773 = vld [vmem:[%s9 + $0x4] sm:$0xf]
        %v774 = vld [vmem:[%s9 + $0x8] sm:$0xf]
        %v775 = vld [vmem:[%s9 + $0xc] sm:$0xf]
        %v776 = vld [vmem:[%s9 + $0x10] sm:$0xf]
        %v777 = vld [vmem:[%s9 + $0x14] sm:$0xf]
        %v778 = vld [vmem:[%s9 + $0x18] sm:$0xf]
        %v779 = vld [vmem:[%s9 + $0x1c] sm:$0xf]
        %v780 = vld [vmem:[%s9 + $0x20] sm:$0xf]
        %v781 = vld [vmem:[%s9 + $0x24] sm:$0xf]
        %v782 = vld [vmem:[%s9 + $0x28] sm:$0xf]
        %v783 = vld [vmem:[%s9 + $0x2c] sm:$0xf]
        %v784 = vld [vmem:[%s9 + $0x30] sm:$0xf]
        %v785 = vld [vmem:[%s9 + $0x34] sm:$0xf]
        %v786 = vld [vmem:[%s9 + $0x38] sm:$0xf]
        %v787 = vld [vmem:[%s9 + $0x3c] sm:$0xf]
        %v788 = vld [vmem:[%s10] sm:$0x1]
        %v790 = vperm.slane %v788, 0
        %v808 = vunpack.c.l.b16 %v772
        %v809 = vunpack.c.l.b16 %v773
        %v810 = vunpack.c.l.b16 %v774
        %v811 = vunpack.c.l.b16 %v775
        %v812 = vunpack.c.l.b16 %v776
        %v813 = vunpack.c.l.b16 %v777
        %v814 = vunpack.c.l.b16 %v778
        %v815 = vunpack.c.l.b16 %v779
        %v816 = vunpack.c.l.b16 %v780
        %v817 = vunpack.c.l.b16 %v781
        %v818 = vunpack.c.l.b16 %v782
        %v819 = vunpack.c.l.b16 %v783
        %v820 = vunpack.c.l.b16 %v784
        %v821 = vunpack.c.l.b16 %v785
        %v822 = vunpack.c.l.b16 %v786
        %v823 = vunpack.c.l.b16 %v787
        %v824 = vpack.c.b16 %v809, %v808
        %v825 = vpack.c.b16 %v811, %v810
        %v826 = vpack.c.b16 %v813, %v812
        %v827 = vpack.c.b16 %v815, %v814
        %v828 = vpack.c.b16 %v817, %v816
        %v829 = vpack.c.b16 %v819, %v818
        %v830 = vpack.c.b16 %v821, %v820
        %v831 = vpack.c.b16 %v823, %v822
        %840 = vmatpush.bf16.msra.mxu0 %v831
        %841 = vmatpush.bf16.msra.mxu0 %v830
        %842 = vmatpush.bf16.msra.mxu0 %v829
        %843 = vmatpush.bf16.msra.mxu0 %v828
        %844 = vmatpush.bf16.msra.mxu0 %v827
        %845 = vmatpush.bf16.msra.mxu0 %v826
        %846 = vmatpush.bf16.msra.mxu0 %v825
        %847 = vmatpush.bf16.msra.mxu0 %v824
        %848 = vmatmul.bf16.gmra.mxu0 %v771
        %v849 = vpop.f32.mrf.mxu0
        %v850 = vadd.f32 %v790, %v849
        %v851 = vpop.f32.mrf.mxu0
        %852 = vdwg.mxu0
        %v853 = vadd.f32 %v732, %v850
        %v854 = vsel %vm469, %v853, 0.0
        %855 = vadd.xlane.f32.xlu0 %v854
        %v856 = vpop.xlane.xlu0 %855
        %v857 = vmul.f32 %v856, %v703
        %v858 = vsub.f32 %v853, %v857
        %v859 = vmul.f32 %v858, %v858
        %v860 = vsel %vm469, %v859, 0.0
        %861 = vadd.xlane.f32.xlu0 %v860
        %v862 = vpop.xlane.xlu0 %861
        %v863 = vmul.f32 %v862, %v703
        %v864 = vadd.f32 %v863, 1e-05
        %v865 = vrsqrt.pop %v864
        %v866 = vmul.f32 %v865, %v864
        %v867 = vmul.f32 %v866, %v865
        %v868 = vmul.f32 0.5, %v867
        %v869 = vsub.f32 1.5, %v868
        %v870 = vmul.f32 %v865, %v869
        %vm871 = vweird.f32 %v864
        %vm872 = vweird.f32 %v865
        %vm873 = vmor %vm871, %vm872
        %v874 = vsel %vm873, %v865, %v870
        %v875 = vmul.f32 %v858, %v874
        %v876 = vld [vmem:[%s11] sm:$0x1]
        %v878 = vperm.slane %v876, 0
        %v880 = vmul.f32 %v875, %v878
        %v881 = vld [vmem:[%s12] sm:$0x1]
        %v883 = vperm.slane %v881, 0
        %v885 = vadd.f32 %v880, %v883
        %v886 = vpack.c.bf16 %v885, %v885
        %vm887 = vcmask 257024
        %888 = vst.msk [vmem:[%s431] sm:$0xf] %vm887, %v886
        %s889 = sand.u32 %s313, 1
        %s890 = scalar_lea.sflag [#allocation3], %s889
        %s891 = sand.u32 %s313, 1
        %s892 = smul.addr %s891, 4
        %s893 = scalar_lea.vmem [#allocation2], %s892
        // Predicated region
        $region73: #{tpu_custom_call.1} parent=71 // pred_check
          %p894 = pneg %p323
        $region74: #{tpu_custom_call.1} parent=71 // pred_check_branch
          %896 = sbr.rel (%p894) target = $region76
        $region75: #{tpu_custom_call.1} parent=71 // pred_region
          %898 = vsyncadd %s890, 0
          %s899 = smul.addr %s27, 4
          %s900 = scalar_lea.hbm %s13, %s899
          %s902 = sshll.u32 %s893, 4
          %s903 = int_to_ptr.vmem [resolvable:$true] %s902
          %s904 = sshll.u32 %s900, 4
          %s905 = int_to_ptr.hbm [resolvable:$true] %s904
          %907 = dma.vmem_to_hbm [thread:$0]  %s903, 64, %s905, %s890
        $region76: #{tpu_custom_call.1} parent=71 // pred_fallthru
          _
      $region72: #{tpu_custom_call.1} parent=5 // pred_fallthru
        _
      %p908 = scmp.le.s32.totalorder 2, %s22
      // Predicated region
      $region77: #{tpu_custom_call.1} parent=5 // pred_check
        %p909 = pneg %p908
      $region78: #{tpu_custom_call.1} parent=5 // pred_check_branch
        %911 = sbr.rel (%p909) target = $region80
      $region79: #{tpu_custom_call.1} parent=5 // pred_region
        %s912 = ssub.s32 %s22, 2
        // Predicated region
        $region81: #{tpu_custom_call.1} parent=79 // pred_check
          %p913 = pneg %p329
        $region82: #{tpu_custom_call.1} parent=79 // pred_check_branch
          %915 = sbr.rel (%p913) target = $region84
        $region83: #{tpu_custom_call.1} parent=79 // pred_region
          %s916 = sand.u32 %s314, 1
          %s917 = scalar_lea.sflag [#allocation3], %s916
          %s918 = sand.u32 %s314, 1
          %s919 = smul.addr %s918, 4
          %s920 = scalar_lea.vmem [#allocation2], %s919
          %922 = dma.done %s917, 64
        $region84: #{tpu_custom_call.1} parent=79 // pred_fallthru
          _
      $region80: #{tpu_custom_call.1} parent=5 // pred_fallthru
        _
    $region6: #{tpu_custom_call.1} parent=1 // loop_footer
      %s26 = sadd.s32 1, %s22
    $region7: #{tpu_custom_call.1} parent=1 // loop_footer_branch
      %21 = sbr.rel target = $region3
    $region8: #{tpu_custom_call.1} parent=1 // loop_exit
      _
    %923 = vsyncpa [#allocation3], 1
    %s924 = scalar_lea.sflag [#allocation3], 1
    %925 = vsyncpa %s924, 1

</llo_original>
